<compile_context>
chip_gen: v7x
topology: tpu7x:2x2x1
jax: 0.10.0
libtpu: 0.0.40
codegen_flags: <defaults>
</compile_context>

<pallas_src>
import functools

import jax
import jax.numpy as jnp
from jax.experimental import pallas as pl
from jax.experimental.pallas import tpu as pltpu

# ---------------- model sizes (small, synthetic) ----------------
SRC_VOCAB = 32
TRG_VOCAB = 32
EMB = 16
HID = 32
SRC_LEN = 8
TRG_LEN = 8
BATCH = 2        # NOTE: only 2/8 sublanes occupied; pad batch for real use
VPAD = 128       # lane-dense logits width (vocab padded to full 128 lanes)


def _lstm_cell(gates, c, hid):
    """gates: (B, 4H) f32, torch gate order (i, f, g, o)."""
    H = hid
    sig = jax.nn.sigmoid(gates)          # full-vreg EUP op
    th = jnp.tanh(gates)                 # full-vreg EUP op
    i = sig[:, 0 * H:1 * H]
    f = sig[:, 1 * H:2 * H]
    g = th[:, 2 * H:3 * H]
    o = sig[:, 3 * H:4 * H]
    c_new = f * c + i * g
    h_new = o * jnp.tanh(c_new)
    return h_new, c_new


# ================= single fused encoder+decoder kernel =================
def _seq2seq_kernel(tf_ref,                              # SMEM  (T,) int32
                    xproj_ref,                           # VMEM  (S, B, 4H) f32
                    enc_whh_ref, enc_b_ref,              # VMEM  (H,4H) bf16 / (1,4H) f32
                    toh_ref,                             # VMEM  (T, B, V) f32 teacher one-hots
                    dec_w_ref, dec_b_ref,                # VMEM  (V+H,4H) bf16 / (1,4H) f32
                    fcw_ref, fcb_ref,                    # VMEM  (H,VPAD) bf16 / (1,VPAD) f32
                    out_ref,                             # VMEM  (T, B, VPAD) f32
                    *, hid, vocab, vpad, batch, src_len, trg_len):
    B, H, V, VP = batch, hid, vocab, vpad

    # ---------------- encoder (input projection precomputed outside) --------
    enc_whh = enc_whh_ref[...]
    enc_b = enc_b_ref[...]
    h = jnp.zeros((B, H), jnp.float32)
    c = jnp.zeros((B, H), jnp.float32)
    for t in range(src_len):
        gates = (xproj_ref[t]
                 + jnp.dot(h.astype(jnp.bfloat16), enc_whh,
                           preferred_element_type=jnp.float32)
                 + enc_b)
        h, c = _lstm_cell(gates, c, H)

    # ---------------- decoder (teacher forcing + greedy argmax) -------------
    # hoisted constants / weights (JAX does not CSE broadcast_in_dim)
    lane_iota = jax.lax.broadcasted_iota(jnp.int32, (B, VP), 1)
    vocab_iota = jax.lax.broadcasted_iota(jnp.int32, (B, V), 1)
    dec_w = dec_w_ref[...]
    dec_b = dec_b_ref[...]
    fcw = fcw_ref[...]
    fcb = fcb_ref[...]

    out_ref[0] = jnp.zeros((B, VP), jnp.float32)         # outputs[0] stays 0
    x_oh = toh_ref[0]                                    # x = target[0]

    for t in range(1, trg_len):
        # fused gate matmul: [x_onehot | h] @ [Emb@Wih ; Whh]  (one MXU op)
        xin = jnp.concatenate([x_oh, h], axis=1).astype(jnp.bfloat16)
        gates = jnp.dot(xin, dec_w, preferred_element_type=jnp.float32) + dec_b
        h, c = _lstm_cell(gates, c, H)

        # lane-dense logits (padded lanes carry a -1e30 bias -> never argmax)
        logits = (jnp.dot(h.astype(jnp.bfloat16), fcw,
                          preferred_element_type=jnp.float32) + fcb)   # (B, VPAD)
        out_ref[t] = logits

        if t < trg_len - 1:                              # last-step update is dead work
            # greedy best_guess: first index of the max (exact argmax semantics)
            mx = jnp.max(logits, axis=1, keepdims=True)
            best = jnp.min(jnp.where(logits == mx, lane_iota, VP),
                           axis=1, keepdims=True)
            best_oh = (vocab_iota == best).astype(jnp.float32)
            # teacher forcing: next input = target[t] if flag else best_guess
            use_teacher = tf_ref[t] > 0
            x_oh = jnp.where(use_teacher, toh_ref[t], best_oh)


def seq2seq_pallas(tf_flags, enc_xproj, enc_whh, enc_b,
                   teacher_oh, dec_w_fused, dec_b, fc_w_pad, fc_b_pad):
    S, B, _ = enc_xproj.shape
    T, _, V = teacher_oh.shape
    H = enc_whh.shape[0]
    VP = fc_w_pad.shape[1]

    vmem = pl.BlockSpec(memory_space=pltpu.MemorySpace.VMEM)
    smem = pl.BlockSpec(memory_space=pltpu.MemorySpace.SMEM)
    kern = functools.partial(_seq2seq_kernel, hid=H, vocab=V, vpad=VP,
                             batch=B, src_len=S, trg_len=T)
    return pl.pallas_call(
        kern,
        out_shape=jax.ShapeDtypeStruct((T, B, VP), jnp.float32),
        in_specs=[smem, vmem, vmem, vmem, vmem, vmem, vmem, vmem, vmem],
        out_specs=vmem,
    )(tf_flags, enc_xproj, enc_whh, enc_b,
      teacher_oh, dec_w_fused, dec_b, fc_w_pad, fc_b_pad)


# ====================== full seq2seq forward (jit) ======================
@functools.partial(jax.jit, static_argnames=("teacher_force_ratio",))
def seq2seq_forward(params, source, target, key, teacher_force_ratio=0.5):
    trg_len, _ = target.shape

    # teacher-forcing coin flips drawn once (random.random() < ratio per step)
    probs = jax.random.uniform(key, (trg_len,))
    tf_flags = (probs < teacher_force_ratio).astype(jnp.int32)

    # encoder input projection: gather fused (embedding @ Wih) rows -> [S,B,4H]
    enc_xproj = jnp.take(params["enc_emb_wih"], source, axis=0)
    # decoder teacher inputs as one-hots -> [T,B,V] (tiny, VMEM resident)
    teacher_oh = jax.nn.one_hot(target, TRG_VOCAB, dtype=jnp.float32)

    out_pad = seq2seq_pallas(
        tf_flags, enc_xproj, params["enc_whh_bf16"], params["enc_b"],
        teacher_oh, params["dec_w_fused"], params["dec_b"],
        params["dec_fc_w_pad"], params["dec_fc_b_pad"])       # [T, B, VPAD]

    return out_pad[:, :, :TRG_VOCAB]                          # lane slice only


# ====================== parameter init / preparation ======================
def init_params(key):
    ks = jax.random.split(key, 10)
    s = 0.1
    return {
        "enc_emb": jax.random.normal(ks[0], (SRC_VOCAB, EMB), jnp.float32) * s,
        "enc_wih": jax.random.normal(ks[1], (EMB, 4 * HID), jnp.float32) * s,
        "enc_whh": jax.random.normal(ks[2], (HID, 4 * HID), jnp.float32) * s,
        "enc_b":   jax.random.normal(ks[3], (1, 4 * HID), jnp.float32) * s,
        "dec_emb": jax.random.normal(ks[4], (TRG_VOCAB, EMB), jnp.float32) * s,
        "dec_wih": jax.random.normal(ks[5], (EMB, 4 * HID), jnp.float32) * s,
        "dec_whh": jax.random.normal(ks[6], (HID, 4 * HID), jnp.float32) * s,
        "dec_b":   jax.random.normal(ks[7], (1, 4 * HID), jnp.float32) * s,
        "dec_fc_w": jax.random.normal(ks[8], (HID, TRG_VOCAB), jnp.float32) * s,
        "dec_fc_b": jax.random.normal(ks[9], (1, TRG_VOCAB), jnp.float32) * s,
    }


def prepare_params(raw):
    """One-time fusion/padding/casting of raw (torch-layout) params."""
    # Fold embedding into the input projection: (onehot@E)@Wih == onehot@(E@Wih)
    enc_emb_wih = raw["enc_emb"] @ raw["enc_wih"]             # [SRC_VOCAB, 4H] f32
    dec_emb_wih = raw["dec_emb"] @ raw["dec_wih"]             # [TRG_VOCAB, 4H]
    # Fuse the two decoder gate matmuls: [Emb@Wih ; Whh] -> (V+H, 4H), bf16 for MXU
    dec_w_fused = jnp.concatenate([dec_emb_wih, raw["dec_whh"]],
                                  axis=0).astype(jnp.bfloat16)
    # Lane-dense vocab projection: pad columns with 0-weights and -1e30 bias
    fc_w_pad = jnp.zeros((HID, VPAD), jnp.float32).at[:, :TRG_VOCAB].set(raw["dec_fc_w"])
    fc_b_pad = jnp.full((1, VPAD), -1e30, jnp.float32).at[:, :TRG_VOCAB].set(raw["dec_fc_b"])
    return {
        "enc_emb_wih": enc_emb_wih,                           # f32 (added, not MXU operand)
        "enc_whh_bf16": raw["enc_whh"].astype(jnp.bfloat16),  # bf16 MXU operand
        "enc_b": raw["enc_b"],                                # f32
        "dec_w_fused": dec_w_fused,                           # bf16 MXU operand
        "dec_b": raw["dec_b"],                                # f32
        "dec_fc_w_pad": fc_w_pad.astype(jnp.bfloat16),        # bf16 MXU operand
        "dec_fc_b_pad": fc_b_pad,                             # f32 (-1e30 pad bias)
    }


if __name__ == "__main__":
    root = jax.random.PRNGKey(0)
    k_params, k_src, k_trg, k_tf = jax.random.split(root, 4)

    params = prepare_params(init_params(k_params))
    source = jax.random.randint(k_src, (SRC_LEN, BATCH), 0, SRC_VOCAB, jnp.int32)
    target = jax.random.randint(k_trg, (TRG_LEN, BATCH), 0, TRG_VOCAB, jnp.int32)

    outputs = seq2seq_forward(params, source, target, k_tf,
                              teacher_force_ratio=0.5)
    outputs = jax.block_until_ready(outputs)

    assert outputs.shape == (TRG_LEN, BATCH, TRG_VOCAB)
    assert bool(jnp.all(outputs[0] == 0.0))     # outputs[0] untouched, like torch
    assert bool(jnp.all(jnp.isfinite(outputs)))
    print("KERNEL_OK")
</pallas_src>

<mosaic_0001>
module attributes {stable_mosaic.version = 11 : i64} {
  func.func @_seq2seq_kernel(%arg0: memref<8xi32, #tpu.memory_space<smem>>, %arg1: memref<8x2x128xf32, #tpu.memory_space<vmem>>, %arg2: memref<32x128xbf16, #tpu.memory_space<vmem>>, %arg3: memref<1x128xf32, #tpu.memory_space<vmem>>, %arg4: memref<8x2x32xf32, #tpu.memory_space<vmem>>, %arg5: memref<64x128xbf16, #tpu.memory_space<vmem>>, %arg6: memref<1x128xf32, #tpu.memory_space<vmem>>, %arg7: memref<32x128xbf16, #tpu.memory_space<vmem>>, %arg8: memref<1x128xf32, #tpu.memory_space<vmem>>, %arg9: memref<8x2x128xf32, #tpu.memory_space<vmem>>) attributes {dimension_semantics = [], scalar_prefetch = 0 : i64, scratch_operands = 0 : i64, tpu.core_type = #tpu.core_type<tc>} {
    %c0 = arith.constant 0 : index
    %c0_0 = arith.constant 0 : index
    %0 = vector.load %arg2[%c0, %c0_0] : memref<32x128xbf16, #tpu.memory_space<vmem>>, vector<32x128xbf16>
    %c0_1 = arith.constant 0 : index
    %c0_2 = arith.constant 0 : index
    %1 = vector.load %arg3[%c0_1, %c0_2] : memref<1x128xf32, #tpu.memory_space<vmem>>, vector<1x128xf32>
    %cst = arith.constant 0.000000e+00 : f32
    %2 = vector.broadcast %cst : f32 to vector<2x32xf32>
    %cst_3 = arith.constant 0.000000e+00 : f32
    %3 = vector.broadcast %cst_3 : f32 to vector<2x32xf32>
    %c0_4 = arith.constant 0 : index
    %c0_5 = arith.constant 0 : index
    %c0_6 = arith.constant 0 : index
    %4 = vector.load %arg1[%c0_4, %c0_5, %c0_6] : memref<8x2x128xf32, #tpu.memory_space<vmem>>, vector<1x2x128xf32>
    %5 = vector.shape_cast %4 : vector<1x2x128xf32> to vector<2x128xf32>
    %6 = arith.truncf %2 : vector<2x32xf32> to vector<2x32xbf16>
    %cst_7 = arith.constant dense<0.000000e+00> : vector<2x128xf32>
    %7 = tpu.matmul %6, %0, %cst_7 {dimension_numbers = #tpu.dot_dimension_numbers<[1], [0], [0], [1], [0, 0, 1, 1], [], []>} : vector<2x32xbf16>, vector<32x128xbf16>, vector<2x128xf32> -> vector<2x128xf32>
    %8 = arith.addf %5, %7 : vector<2x128xf32>
    %9 = vector.broadcast %1 : vector<1x128xf32> to vector<2x128xf32>
    %10 = arith.addf %8, %9 : vector<2x128xf32>
    %11 = arith.negf %10 : vector<2x128xf32>
    %12 = math.exp %11 : vector<2x128xf32>
    %cst_8 = arith.constant 1.000000e+00 : f32
    %13 = vector.broadcast %cst_8 : f32 to vector<2x128xf32>
    %14 = arith.addf %13, %12 : vector<2x128xf32>
    %15 = arith.divf %13, %14 : vector<2x128xf32>
    %16 = math.tanh %10 : vector<2x128xf32>
    %17 = vector.extract_strided_slice %15 {offsets = [0, 0], sizes = [2, 32], strides = [1, 1]} : vector<2x128xf32> to vector<2x32xf32>
    %18 = vector.extract_strided_slice %15 {offsets = [0, 32], sizes = [2, 32], strides = [1, 1]} : vector<2x128xf32> to vector<2x32xf32>
    %19 = vector.extract_strided_slice %16 {offsets = [0, 64], sizes = [2, 32], strides = [1, 1]} : vector<2x128xf32> to vector<2x32xf32>
    %20 = vector.extract_strided_slice %15 {offsets = [0, 96], sizes = [2, 32], strides = [1, 1]} : vector<2x128xf32> to vector<2x32xf32>
    %21 = arith.mulf %18, %3 : vector<2x32xf32>
    %22 = arith.mulf %17, %19 : vector<2x32xf32>
    %23 = arith.addf %21, %22 : vector<2x32xf32>
    %24 = math.tanh %23 : vector<2x32xf32>
    %25 = arith.mulf %20, %24 : vector<2x32xf32>
    %c1 = arith.constant 1 : index
    %c0_9 = arith.constant 0 : index
    %c0_10 = arith.constant 0 : index
    %26 = vector.load %arg1[%c1, %c0_9, %c0_10] : memref<8x2x128xf32, #tpu.memory_space<vmem>>, vector<1x2x128xf32>
    %27 = vector.shape_cast %26 : vector<1x2x128xf32> to vector<2x128xf32>
    %28 = arith.truncf %25 : vector<2x32xf32> to vector<2x32xbf16>
    %cst_11 = arith.constant dense<0.000000e+00> : vector<2x128xf32>
    %29 = tpu.matmul %28, %0, %cst_11 {dimension_numbers = #tpu.dot_dimension_numbers<[1], [0], [0], [1], [0, 0, 1, 1], [], []>} : vector<2x32xbf16>, vector<32x128xbf16>, vector<2x128xf32> -> vector<2x128xf32>
    %30 = arith.addf %27, %29 : vector<2x128xf32>
    %31 = vector.broadcast %1 : vector<1x128xf32> to vector<2x128xf32>
    %32 = arith.addf %30, %31 : vector<2x128xf32>
    %33 = arith.negf %32 : vector<2x128xf32>
    %34 = math.exp %33 : vector<2x128xf32>
    %cst_12 = arith.constant 1.000000e+00 : f32
    %35 = vector.broadcast %cst_12 : f32 to vector<2x128xf32>
    %36 = arith.addf %35, %34 : vector<2x128xf32>
    %37 = arith.divf %35, %36 : vector<2x128xf32>
    %38 = math.tanh %32 : vector<2x128xf32>
    %39 = vector.extract_strided_slice %37 {offsets = [0, 0], sizes = [2, 32], strides = [1, 1]} : vector<2x128xf32> to vector<2x32xf32>
    %40 = vector.extract_strided_slice %37 {offsets = [0, 32], sizes = [2, 32], strides = [1, 1]} : vector<2x128xf32> to vector<2x32xf32>
    %41 = vector.extract_strided_slice %38 {offsets = [0, 64], sizes = [2, 32], strides = [1, 1]} : vector<2x128xf32> to vector<2x32xf32>
    %42 = vector.extract_strided_slice %37 {offsets = [0, 96], sizes = [2, 32], strides = [1, 1]} : vector<2x128xf32> to vector<2x32xf32>
    %43 = arith.mulf %40, %23 : vector<2x32xf32>
    %44 = arith.mulf %39, %41 : vector<2x32xf32>
    %45 = arith.addf %43, %44 : vector<2x32xf32>
    %46 = math.tanh %45 : vector<2x32xf32>
    %47 = arith.mulf %42, %46 : vector<2x32xf32>
    %c2 = arith.constant 2 : index
    %c0_13 = arith.constant 0 : index
    %c0_14 = arith.constant 0 : index
    %48 = vector.load %arg1[%c2, %c0_13, %c0_14] : memref<8x2x128xf32, #tpu.memory_space<vmem>>, vector<1x2x128xf32>
    %49 = vector.shape_cast %48 : vector<1x2x128xf32> to vector<2x128xf32>
    %50 = arith.truncf %47 : vector<2x32xf32> to vector<2x32xbf16>
    %cst_15 = arith.constant dense<0.000000e+00> : vector<2x128xf32>
    %51 = tpu.matmul %50, %0, %cst_15 {dimension_numbers = #tpu.dot_dimension_numbers<[1], [0], [0], [1], [0, 0, 1, 1], [], []>} : vector<2x32xbf16>, vector<32x128xbf16>, vector<2x128xf32> -> vector<2x128xf32>
    %52 = arith.addf %49, %51 : vector<2x128xf32>
    %53 = vector.broadcast %1 : vector<1x128xf32> to vector<2x128xf32>
    %54 = arith.addf %52, %53 : vector<2x128xf32>
    %55 = arith.negf %54 : vector<2x128xf32>
    %56 = math.exp %55 : vector<2x128xf32>
    %cst_16 = arith.constant 1.000000e+00 : f32
    %57 = vector.broadcast %cst_16 : f32 to vector<2x128xf32>
    %58 = arith.addf %57, %56 : vector<2x128xf32>
    %59 = arith.divf %57, %58 : vector<2x128xf32>
    %60 = math.tanh %54 : vector<2x128xf32>
    %61 = vector.extract_strided_slice %59 {offsets = [0, 0], sizes = [2, 32], strides = [1, 1]} : vector<2x128xf32> to vector<2x32xf32>
    %62 = vector.extract_strided_slice %59 {offsets = [0, 32], sizes = [2, 32], strides = [1, 1]} : vector<2x128xf32> to vector<2x32xf32>
    %63 = vector.extract_strided_slice %60 {offsets = [0, 64], sizes = [2, 32], strides = [1, 1]} : vector<2x128xf32> to vector<2x32xf32>
    %64 = vector.extract_strided_slice %59 {offsets = [0, 96], sizes = [2, 32], strides = [1, 1]} : vector<2x128xf32> to vector<2x32xf32>
    %65 = arith.mulf %62, %45 : vector<2x32xf32>
    %66 = arith.mulf %61, %63 : vector<2x32xf32>
    %67 = arith.addf %65, %66 : vector<2x32xf32>
    %68 = math.tanh %67 : vector<2x32xf32>
    %69 = arith.mulf %64, %68 : vector<2x32xf32>
    %c3 = arith.constant 3 : index
    %c0_17 = arith.constant 0 : index
    %c0_18 = arith.constant 0 : index
    %70 = vector.load %arg1[%c3, %c0_17, %c0_18] : memref<8x2x128xf32, #tpu.memory_space<vmem>>, vector<1x2x128xf32>
    %71 = vector.shape_cast %70 : vector<1x2x128xf32> to vector<2x128xf32>
    %72 = arith.truncf %69 : vector<2x32xf32> to vector<2x32xbf16>
    %cst_19 = arith.constant dense<0.000000e+00> : vector<2x128xf32>
    %73 = tpu.matmul %72, %0, %cst_19 {dimension_numbers = #tpu.dot_dimension_numbers<[1], [0], [0], [1], [0, 0, 1, 1], [], []>} : vector<2x32xbf16>, vector<32x128xbf16>, vector<2x128xf32> -> vector<2x128xf32>
    %74 = arith.addf %71, %73 : vector<2x128xf32>
    %75 = vector.broadcast %1 : vector<1x128xf32> to vector<2x128xf32>
    %76 = arith.addf %74, %75 : vector<2x128xf32>
    %77 = arith.negf %76 : vector<2x128xf32>
    %78 = math.exp %77 : vector<2x128xf32>
    %cst_20 = arith.constant 1.000000e+00 : f32
    %79 = vector.broadcast %cst_20 : f32 to vector<2x128xf32>
    %80 = arith.addf %79, %78 : vector<2x128xf32>
    %81 = arith.divf %79, %80 : vector<2x128xf32>
    %82 = math.tanh %76 : vector<2x128xf32>
    %83 = vector.extract_strided_slice %81 {offsets = [0, 0], sizes = [2, 32], strides = [1, 1]} : vector<2x128xf32> to vector<2x32xf32>
    %84 = vector.extract_strided_slice %81 {offsets = [0, 32], sizes = [2, 32], strides = [1, 1]} : vector<2x128xf32> to vector<2x32xf32>
    %85 = vector.extract_strided_slice %82 {offsets = [0, 64], sizes = [2, 32], strides = [1, 1]} : vector<2x128xf32> to vector<2x32xf32>
    %86 = vector.extract_strided_slice %81 {offsets = [0, 96], sizes = [2, 32], strides = [1, 1]} : vector<2x128xf32> to vector<2x32xf32>
    %87 = arith.mulf %84, %67 : vector<2x32xf32>
    %88 = arith.mulf %83, %85 : vector<2x32xf32>
    %89 = arith.addf %87, %88 : vector<2x32xf32>
    %90 = math.tanh %89 : vector<2x32xf32>
    %91 = arith.mulf %86, %90 : vector<2x32xf32>
    %c4 = arith.constant 4 : index
    %c0_21 = arith.constant 0 : index
    %c0_22 = arith.constant 0 : index
    %92 = vector.load %arg1[%c4, %c0_21, %c0_22] : memref<8x2x128xf32, #tpu.memory_space<vmem>>, vector<1x2x128xf32>
    %93 = vector.shape_cast %92 : vector<1x2x128xf32> to vector<2x128xf32>
    %94 = arith.truncf %91 : vector<2x32xf32> to vector<2x32xbf16>
    %cst_23 = arith.constant dense<0.000000e+00> : vector<2x128xf32>
    %95 = tpu.matmul %94, %0, %cst_23 {dimension_numbers = #tpu.dot_dimension_numbers<[1], [0], [0], [1], [0, 0, 1, 1], [], []>} : vector<2x32xbf16>, vector<32x128xbf16>, vector<2x128xf32> -> vector<2x128xf32>
    %96 = arith.addf %93, %95 : vector<2x128xf32>
    %97 = vector.broadcast %1 : vector<1x128xf32> to vector<2x128xf32>
    %98 = arith.addf %96, %97 : vector<2x128xf32>
    %99 = arith.negf %98 : vector<2x128xf32>
    %100 = math.exp %99 : vector<2x128xf32>
    %cst_24 = arith.constant 1.000000e+00 : f32
    %101 = vector.broadcast %cst_24 : f32 to vector<2x128xf32>
    %102 = arith.addf %101, %100 : vector<2x128xf32>
    %103 = arith.divf %101, %102 : vector<2x128xf32>
    %104 = math.tanh %98 : vector<2x128xf32>
    %105 = vector.extract_strided_slice %103 {offsets = [0, 0], sizes = [2, 32], strides = [1, 1]} : vector<2x128xf32> to vector<2x32xf32>
    %106 = vector.extract_strided_slice %103 {offsets = [0, 32], sizes = [2, 32], strides = [1, 1]} : vector<2x128xf32> to vector<2x32xf32>
    %107 = vector.extract_strided_slice %104 {offsets = [0, 64], sizes = [2, 32], strides = [1, 1]} : vector<2x128xf32> to vector<2x32xf32>
    %108 = vector.extract_strided_slice %103 {offsets = [0, 96], sizes = [2, 32], strides = [1, 1]} : vector<2x128xf32> to vector<2x32xf32>
    %109 = arith.mulf %106, %89 : vector<2x32xf32>
    %110 = arith.mulf %105, %107 : vector<2x32xf32>
    %111 = arith.addf %109, %110 : vector<2x32xf32>
    %112 = math.tanh %111 : vector<2x32xf32>
    %113 = arith.mulf %108, %112 : vector<2x32xf32>
    %c5 = arith.constant 5 : index
    %c0_25 = arith.constant 0 : index
    %c0_26 = arith.constant 0 : index
    %114 = vector.load %arg1[%c5, %c0_25, %c0_26] : memref<8x2x128xf32, #tpu.memory_space<vmem>>, vector<1x2x128xf32>
    %115 = vector.shape_cast %114 : vector<1x2x128xf32> to vector<2x128xf32>
    %116 = arith.truncf %113 : vector<2x32xf32> to vector<2x32xbf16>
    %cst_27 = arith.constant dense<0.000000e+00> : vector<2x128xf32>
    %117 = tpu.matmul %116, %0, %cst_27 {dimension_numbers = #tpu.dot_dimension_numbers<[1], [0], [0], [1], [0, 0, 1, 1], [], []>} : vector<2x32xbf16>, vector<32x128xbf16>, vector<2x128xf32> -> vector<2x128xf32>
    %118 = arith.addf %115, %117 : vector<2x128xf32>
    %119 = vector.broadcast %1 : vector<1x128xf32> to vector<2x128xf32>
    %120 = arith.addf %118, %119 : vector<2x128xf32>
    %121 = arith.negf %120 : vector<2x128xf32>
    %122 = math.exp %121 : vector<2x128xf32>
    %cst_28 = arith.constant 1.000000e+00 : f32
    %123 = vector.broadcast %cst_28 : f32 to vector<2x128xf32>
    %124 = arith.addf %123, %122 : vector<2x128xf32>
    %125 = arith.divf %123, %124 : vector<2x128xf32>
    %126 = math.tanh %120 : vector<2x128xf32>
    %127 = vector.extract_strided_slice %125 {offsets = [0, 0], sizes = [2, 32], strides = [1, 1]} : vector<2x128xf32> to vector<2x32xf32>
    %128 = vector.extract_strided_slice %125 {offsets = [0, 32], sizes = [2, 32], strides = [1, 1]} : vector<2x128xf32> to vector<2x32xf32>
    %129 = vector.extract_strided_slice %126 {offsets = [0, 64], sizes = [2, 32], strides = [1, 1]} : vector<2x128xf32> to vector<2x32xf32>
    %130 = vector.extract_strided_slice %125 {offsets = [0, 96], sizes = [2, 32], strides = [1, 1]} : vector<2x128xf32> to vector<2x32xf32>
    %131 = arith.mulf %128, %111 : vector<2x32xf32>
    %132 = arith.mulf %127, %129 : vector<2x32xf32>
    %133 = arith.addf %131, %132 : vector<2x32xf32>
    %134 = math.tanh %133 : vector<2x32xf32>
    %135 = arith.mulf %130, %134 : vector<2x32xf32>
    %c6 = arith.constant 6 : index
    %c0_29 = arith.constant 0 : index
    %c0_30 = arith.constant 0 : index
    %136 = vector.load %arg1[%c6, %c0_29, %c0_30] : memref<8x2x128xf32, #tpu.memory_space<vmem>>, vector<1x2x128xf32>
    %137 = vector.shape_cast %136 : vector<1x2x128xf32> to vector<2x128xf32>
    %138 = arith.truncf %135 : vector<2x32xf32> to vector<2x32xbf16>
    %cst_31 = arith.constant dense<0.000000e+00> : vector<2x128xf32>
    %139 = tpu.matmul %138, %0, %cst_31 {dimension_numbers = #tpu.dot_dimension_numbers<[1], [0], [0], [1], [0, 0, 1, 1], [], []>} : vector<2x32xbf16>, vector<32x128xbf16>, vector<2x128xf32> -> vector<2x128xf32>
    %140 = arith.addf %137, %139 : vector<2x128xf32>
    %141 = vector.broadcast %1 : vector<1x128xf32> to vector<2x128xf32>
    %142 = arith.addf %140, %141 : vector<2x128xf32>
    %143 = arith.negf %142 : vector<2x128xf32>
    %144 = math.exp %143 : vector<2x128xf32>
    %cst_32 = arith.constant 1.000000e+00 : f32
    %145 = vector.broadcast %cst_32 : f32 to vector<2x128xf32>
    %146 = arith.addf %145, %144 : vector<2x128xf32>
    %147 = arith.divf %145, %146 : vector<2x128xf32>
    %148 = math.tanh %142 : vector<2x128xf32>
    %149 = vector.extract_strided_slice %147 {offsets = [0, 0], sizes = [2, 32], strides = [1, 1]} : vector<2x128xf32> to vector<2x32xf32>
    %150 = vector.extract_strided_slice %147 {offsets = [0, 32], sizes = [2, 32], strides = [1, 1]} : vector<2x128xf32> to vector<2x32xf32>
    %151 = vector.extract_strided_slice %148 {offsets = [0, 64], sizes = [2, 32], strides = [1, 1]} : vector<2x128xf32> to vector<2x32xf32>
    %152 = vector.extract_strided_slice %147 {offsets = [0, 96], sizes = [2, 32], strides = [1, 1]} : vector<2x128xf32> to vector<2x32xf32>
    %153 = arith.mulf %150, %133 : vector<2x32xf32>
    %154 = arith.mulf %149, %151 : vector<2x32xf32>
    %155 = arith.addf %153, %154 : vector<2x32xf32>
    %156 = math.tanh %155 : vector<2x32xf32>
    %157 = arith.mulf %152, %156 : vector<2x32xf32>
    %c7 = arith.constant 7 : index
    %c0_33 = arith.constant 0 : index
    %c0_34 = arith.constant 0 : index
    %158 = vector.load %arg1[%c7, %c0_33, %c0_34] : memref<8x2x128xf32, #tpu.memory_space<vmem>>, vector<1x2x128xf32>
    %159 = vector.shape_cast %158 : vector<1x2x128xf32> to vector<2x128xf32>
    %160 = arith.truncf %157 : vector<2x32xf32> to vector<2x32xbf16>
    %cst_35 = arith.constant dense<0.000000e+00> : vector<2x128xf32>
    %161 = tpu.matmul %160, %0, %cst_35 {dimension_numbers = #tpu.dot_dimension_numbers<[1], [0], [0], [1], [0, 0, 1, 1], [], []>} : vector<2x32xbf16>, vector<32x128xbf16>, vector<2x128xf32> -> vector<2x128xf32>
    %162 = arith.addf %159, %161 : vector<2x128xf32>
    %163 = vector.broadcast %1 : vector<1x128xf32> to vector<2x128xf32>
    %164 = arith.addf %162, %163 : vector<2x128xf32>
    %165 = arith.negf %164 : vector<2x128xf32>
    %166 = math.exp %165 : vector<2x128xf32>
    %cst_36 = arith.constant 1.000000e+00 : f32
    %167 = vector.broadcast %cst_36 : f32 to vector<2x128xf32>
    %168 = arith.addf %167, %166 : vector<2x128xf32>
    %169 = arith.divf %167, %168 : vector<2x128xf32>
    %170 = math.tanh %164 : vector<2x128xf32>
    %171 = vector.extract_strided_slice %169 {offsets = [0, 0], sizes = [2, 32], strides = [1, 1]} : vector<2x128xf32> to vector<2x32xf32>
    %172 = vector.extract_strided_slice %169 {offsets = [0, 32], sizes = [2, 32], strides = [1, 1]} : vector<2x128xf32> to vector<2x32xf32>
    %173 = vector.extract_strided_slice %170 {offsets = [0, 64], sizes = [2, 32], strides = [1, 1]} : vector<2x128xf32> to vector<2x32xf32>
    %174 = vector.extract_strided_slice %169 {offsets = [0, 96], sizes = [2, 32], strides = [1, 1]} : vector<2x128xf32> to vector<2x32xf32>
    %175 = arith.mulf %172, %155 : vector<2x32xf32>
    %176 = arith.mulf %171, %173 : vector<2x32xf32>
    %177 = arith.addf %175, %176 : vector<2x32xf32>
    %178 = math.tanh %177 : vector<2x32xf32>
    %179 = arith.mulf %174, %178 : vector<2x32xf32>
    %180 = tpu.iota {dimensions = array<i32: 1>} : vector<2x128xi32>
    %181 = tpu.iota {dimensions = array<i32: 1>} : vector<2x32xi32>
    %c0_37 = arith.constant 0 : index
    %c0_38 = arith.constant 0 : index
    %182 = vector.load %arg5[%c0_37, %c0_38] : memref<64x128xbf16, #tpu.memory_space<vmem>>, vector<64x128xbf16>
    %c0_39 = arith.constant 0 : index
    %c0_40 = arith.constant 0 : index
    %183 = vector.load %arg6[%c0_39, %c0_40] : memref<1x128xf32, #tpu.memory_space<vmem>>, vector<1x128xf32>
    %c0_41 = arith.constant 0 : index
    %c0_42 = arith.constant 0 : index
    %184 = vector.load %arg7[%c0_41, %c0_42] : memref<32x128xbf16, #tpu.memory_space<vmem>>, vector<32x128xbf16>
    %c0_43 = arith.constant 0 : index
    %c0_44 = arith.constant 0 : index
    %185 = vector.load %arg8[%c0_43, %c0_44] : memref<1x128xf32, #tpu.memory_space<vmem>>, vector<1x128xf32>
    %cst_45 = arith.constant 0.000000e+00 : f32
    %186 = vector.broadcast %cst_45 : f32 to vector<2x128xf32>
    %c0_46 = arith.constant 0 : index
    %c0_47 = arith.constant 0 : index
    %c0_48 = arith.constant 0 : index
    %187 = vector.load %arg9[%c0_46, %c0_47, %c0_48] : memref<8x2x128xf32, #tpu.memory_space<vmem>>, vector<1x2x128xf32>
    %188 = vector.shape_cast %187 : vector<1x2x128xf32> to vector<2x128xf32>
    %189 = vector.shape_cast %186 : vector<2x128xf32> to vector<1x2x128xf32>
    tpu.vector_store %arg9[%c0_46, %c0_47, %c0_48], %189 {strides = array<i32>} : memref<8x2x128xf32, #tpu.memory_space<vmem>>, vector<1x2x128xf32>,
    %c0_49 = arith.constant 0 : index
    %c0_50 = arith.constant 0 : index
    %c0_51 = arith.constant 0 : index
    %190 = vector.load %arg4[%c0_49, %c0_50, %c0_51] : memref<8x2x32xf32, #tpu.memory_space<vmem>>, vector<1x2x32xf32>
    %191 = vector.shape_cast %190 : vector<1x2x32xf32> to vector<2x32xf32>
    %192 = tpu.concatenate %191, %179 in 1 : vector<2x32xf32>, vector<2x32xf32> -> vector<2x64xf32>
    %193 = arith.truncf %192 : vector<2x64xf32> to vector<2x64xbf16>
    %cst_52 = arith.constant dense<0.000000e+00> : vector<2x128xf32>
    %194 = tpu.matmul %193, %182, %cst_52 {dimension_numbers = #tpu.dot_dimension_numbers<[1], [0], [0], [1], [0, 0, 1, 1], [], []>} : vector<2x64xbf16>, vector<64x128xbf16>, vector<2x128xf32> -> vector<2x128xf32>
    %195 = vector.broadcast %183 : vector<1x128xf32> to vector<2x128xf32>
    %196 = arith.addf %194, %195 : vector<2x128xf32>
    %197 = arith.negf %196 : vector<2x128xf32>
    %198 = math.exp %197 : vector<2x128xf32>
    %cst_53 = arith.constant 1.000000e+00 : f32
    %199 = vector.broadcast %cst_53 : f32 to vector<2x128xf32>
    %200 = arith.addf %199, %198 : vector<2x128xf32>
    %201 = arith.divf %199, %200 : vector<2x128xf32>
    %202 = math.tanh %196 : vector<2x128xf32>
    %203 = vector.extract_strided_slice %201 {offsets = [0, 0], sizes = [2, 32], strides = [1, 1]} : vector<2x128xf32> to vector<2x32xf32>
    %204 = vector.extract_strided_slice %201 {offsets = [0, 32], sizes = [2, 32], strides = [1, 1]} : vector<2x128xf32> to vector<2x32xf32>
    %205 = vector.extract_strided_slice %202 {offsets = [0, 64], sizes = [2, 32], strides = [1, 1]} : vector<2x128xf32> to vector<2x32xf32>
    %206 = vector.extract_strided_slice %201 {offsets = [0, 96], sizes = [2, 32], strides = [1, 1]} : vector<2x128xf32> to vector<2x32xf32>
    %207 = arith.mulf %204, %177 : vector<2x32xf32>
    %208 = arith.mulf %203, %205 : vector<2x32xf32>
    %209 = arith.addf %207, %208 : vector<2x32xf32>
    %210 = math.tanh %209 : vector<2x32xf32>
    %211 = arith.mulf %206, %210 : vector<2x32xf32>
    %212 = arith.truncf %211 : vector<2x32xf32> to vector<2x32xbf16>
    %cst_54 = arith.constant dense<0.000000e+00> : vector<2x128xf32>
    %213 = tpu.matmul %212, %184, %cst_54 {dimension_numbers = #tpu.dot_dimension_numbers<[1], [0], [0], [1], [0, 0, 1, 1], [], []>} : vector<2x32xbf16>, vector<32x128xbf16>, vector<2x128xf32> -> vector<2x128xf32>
    %214 = vector.broadcast %185 : vector<1x128xf32> to vector<2x128xf32>
    %215 = arith.addf %213, %214 : vector<2x128xf32>
    %c1_55 = arith.constant 1 : index
    %c0_56 = arith.constant 0 : index
    %c0_57 = arith.constant 0 : index
    %216 = vector.load %arg9[%c1_55, %c0_56, %c0_57] : memref<8x2x128xf32, #tpu.memory_space<vmem>>, vector<1x2x128xf32>
    %217 = vector.shape_cast %216 : vector<1x2x128xf32> to vector<2x128xf32>
    %218 = vector.shape_cast %215 : vector<2x128xf32> to vector<1x2x128xf32>
    tpu.vector_store %arg9[%c1_55, %c0_56, %c0_57], %218 {strides = array<i32>} : memref<8x2x128xf32, #tpu.memory_space<vmem>>, vector<1x2x128xf32>,
    %cst_58 = arith.constant dense<0xFF800000> : vector<2xf32>
    %219 = vector.multi_reduction <maximumf>, %215, %cst_58 [1] : vector<2x128xf32> to vector<2xf32>
    %220 = vector.shape_cast %219 : vector<2xf32> to vector<2x1xf32>
    %221 = vector.broadcast %220 : vector<2x1xf32> to vector<2x128xf32>
    %222 = arith.cmpf oeq, %215, %221 : vector<2x128xf32>
    %c128_i32 = arith.constant 128 : i32
    %223 = vector.broadcast %c128_i32 : i32 to vector<2x128xi32>
    %224 = arith.select %222, %180, %223 : vector<2x128xi1>, vector<2x128xi32>
    %cst_59 = arith.constant dense<2147483647> : vector<2xi32>
    %225 = vector.multi_reduction <minsi>, %224, %cst_59 [1] : vector<2x128xi32> to vector<2xi32>
    %226 = vector.shape_cast %225 : vector<2xi32> to vector<2x1xi32>
    %227 = vector.broadcast %226 : vector<2x1xi32> to vector<2x32xi32>
    %228 = arith.cmpi eq, %181, %227 : vector<2x32xi32>
    %229 = arith.extui %228 : vector<2x32xi1> to vector<2x32xi32>
    %230 = arith.sitofp %229 : vector<2x32xi32> to vector<2x32xf32>
    %c1_60 = arith.constant 1 : index
    %231 = memref.load %arg0[%c1_60] : memref<8xi32, #tpu.memory_space<smem>>
    %c0_i32 = arith.constant 0 : i32
    %232 = arith.cmpi sgt, %231, %c0_i32 : i32
    %c1_61 = arith.constant 1 : index
    %c0_62 = arith.constant 0 : index
    %c0_63 = arith.constant 0 : index
    %233 = vector.load %arg4[%c1_61, %c0_62, %c0_63] : memref<8x2x32xf32, #tpu.memory_space<vmem>>, vector<1x2x32xf32>
    %234 = vector.shape_cast %233 : vector<1x2x32xf32> to vector<2x32xf32>
    %235 = arith.select %232, %234, %230 : vector<2x32xf32>
    %236 = tpu.concatenate %235, %211 in 1 : vector<2x32xf32>, vector<2x32xf32> -> vector<2x64xf32>
    %237 = arith.truncf %236 : vector<2x64xf32> to vector<2x64xbf16>
    %cst_64 = arith.constant dense<0.000000e+00> : vector<2x128xf32>
    %238 = tpu.matmul %237, %182, %cst_64 {dimension_numbers = #tpu.dot_dimension_numbers<[1], [0], [0], [1], [0, 0, 1, 1], [], []>} : vector<2x64xbf16>, vector<64x128xbf16>, vector<2x128xf32> -> vector<2x128xf32>
    %239 = vector.broadcast %183 : vector<1x128xf32> to vector<2x128xf32>
    %240 = arith.addf %238, %239 : vector<2x128xf32>
    %241 = arith.negf %240 : vector<2x128xf32>
    %242 = math.exp %241 : vector<2x128xf32>
    %cst_65 = arith.constant 1.000000e+00 : f32
    %243 = vector.broadcast %cst_65 : f32 to vector<2x128xf32>
    %244 = arith.addf %243, %242 : vector<2x128xf32>
    %245 = arith.divf %243, %244 : vector<2x128xf32>
    %246 = math.tanh %240 : vector<2x128xf32>
    %247 = vector.extract_strided_slice %245 {offsets = [0, 0], sizes = [2, 32], strides = [1, 1]} : vector<2x128xf32> to vector<2x32xf32>
    %248 = vector.extract_strided_slice %245 {offsets = [0, 32], sizes = [2, 32], strides = [1, 1]} : vector<2x128xf32> to vector<2x32xf32>
    %249 = vector.extract_strided_slice %246 {offsets = [0, 64], sizes = [2, 32], strides = [1, 1]} : vector<2x128xf32> to vector<2x32xf32>
    %250 = vector.extract_strided_slice %245 {offsets = [0, 96], sizes = [2, 32], strides = [1, 1]} : vector<2x128xf32> to vector<2x32xf32>
    %251 = arith.mulf %248, %209 : vector<2x32xf32>
    %252 = arith.mulf %247, %249 : vector<2x32xf32>
    %253 = arith.addf %251, %252 : vector<2x32xf32>
    %254 = math.tanh %253 : vector<2x32xf32>
    %255 = arith.mulf %250, %254 : vector<2x32xf32>
    %256 = arith.truncf %255 : vector<2x32xf32> to vector<2x32xbf16>
    %cst_66 = arith.constant dense<0.000000e+00> : vector<2x128xf32>
    %257 = tpu.matmul %256, %184, %cst_66 {dimension_numbers = #tpu.dot_dimension_numbers<[1], [0], [0], [1], [0, 0, 1, 1], [], []>} : vector<2x32xbf16>, vector<32x128xbf16>, vector<2x128xf32> -> vector<2x128xf32>
    %258 = vector.broadcast %185 : vector<1x128xf32> to vector<2x128xf32>
    %259 = arith.addf %257, %258 : vector<2x128xf32>
    %c2_67 = arith.constant 2 : index
    %c0_68 = arith.constant 0 : index
    %c0_69 = arith.constant 0 : index
    %260 = vector.load %arg9[%c2_67, %c0_68, %c0_69] : memref<8x2x128xf32, #tpu.memory_space<vmem>>, vector<1x2x128xf32>
    %261 = vector.shape_cast %260 : vector<1x2x128xf32> to vector<2x128xf32>
    %262 = vector.shape_cast %259 : vector<2x128xf32> to vector<1x2x128xf32>
    tpu.vector_store %arg9[%c2_67, %c0_68, %c0_69], %262 {strides = array<i32>} : memref<8x2x128xf32, #tpu.memory_space<vmem>>, vector<1x2x128xf32>,
    %cst_70 = arith.constant dense<0xFF800000> : vector<2xf32>
    %263 = vector.multi_reduction <maximumf>, %259, %cst_70 [1] : vector<2x128xf32> to vector<2xf32>
    %264 = vector.shape_cast %263 : vector<2xf32> to vector<2x1xf32>
    %265 = vector.broadcast %264 : vector<2x1xf32> to vector<2x128xf32>
    %266 = arith.cmpf oeq, %259, %265 : vector<2x128xf32>
    %c128_i32_71 = arith.constant 128 : i32
    %267 = vector.broadcast %c128_i32_71 : i32 to vector<2x128xi32>
    %268 = arith.select %266, %180, %267 : vector<2x128xi1>, vector<2x128xi32>
    %cst_72 = arith.constant dense<2147483647> : vector<2xi32>
    %269 = vector.multi_reduction <minsi>, %268, %cst_72 [1] : vector<2x128xi32> to vector<2xi32>
    %270 = vector.shape_cast %269 : vector<2xi32> to vector<2x1xi32>
    %271 = vector.broadcast %270 : vector<2x1xi32> to vector<2x32xi32>
    %272 = arith.cmpi eq, %181, %271 : vector<2x32xi32>
    %273 = arith.extui %272 : vector<2x32xi1> to vector<2x32xi32>
    %274 = arith.sitofp %273 : vector<2x32xi32> to vector<2x32xf32>
    %c2_73 = arith.constant 2 : index
    %275 = memref.load %arg0[%c2_73] : memref<8xi32, #tpu.memory_space<smem>>
    %c0_i32_74 = arith.constant 0 : i32
    %276 = arith.cmpi sgt, %275, %c0_i32_74 : i32
    %c2_75 = arith.constant 2 : index
    %c0_76 = arith.constant 0 : index
    %c0_77 = arith.constant 0 : index
    %277 = vector.load %arg4[%c2_75, %c0_76, %c0_77] : memref<8x2x32xf32, #tpu.memory_space<vmem>>, vector<1x2x32xf32>
    %278 = vector.shape_cast %277 : vector<1x2x32xf32> to vector<2x32xf32>
    %279 = arith.select %276, %278, %274 : vector<2x32xf32>
    %280 = tpu.concatenate %279, %255 in 1 : vector<2x32xf32>, vector<2x32xf32> -> vector<2x64xf32>
    %281 = arith.truncf %280 : vector<2x64xf32> to vector<2x64xbf16>
    %cst_78 = arith.constant dense<0.000000e+00> : vector<2x128xf32>
    %282 = tpu.matmul %281, %182, %cst_78 {dimension_numbers = #tpu.dot_dimension_numbers<[1], [0], [0], [1], [0, 0, 1, 1], [], []>} : vector<2x64xbf16>, vector<64x128xbf16>, vector<2x128xf32> -> vector<2x128xf32>
    %283 = vector.broadcast %183 : vector<1x128xf32> to vector<2x128xf32>
    %284 = arith.addf %282, %283 : vector<2x128xf32>
    %285 = arith.negf %284 : vector<2x128xf32>
    %286 = math.exp %285 : vector<2x128xf32>
    %cst_79 = arith.constant 1.000000e+00 : f32
    %287 = vector.broadcast %cst_79 : f32 to vector<2x128xf32>
    %288 = arith.addf %287, %286 : vector<2x128xf32>
    %289 = arith.divf %287, %288 : vector<2x128xf32>
    %290 = math.tanh %284 : vector<2x128xf32>
    %291 = vector.extract_strided_slice %289 {offsets = [0, 0], sizes = [2, 32], strides = [1, 1]} : vector<2x128xf32> to vector<2x32xf32>
    %292 = vector.extract_strided_slice %289 {offsets = [0, 32], sizes = [2, 32], strides = [1, 1]} : vector<2x128xf32> to vector<2x32xf32>
    %293 = vector.extract_strided_slice %290 {offsets = [0, 64], sizes = [2, 32], strides = [1, 1]} : vector<2x128xf32> to vector<2x32xf32>
    %294 = vector.extract_strided_slice %289 {offsets = [0, 96], sizes = [2, 32], strides = [1, 1]} : vector<2x128xf32> to vector<2x32xf32>
    %295 = arith.mulf %292, %253 : vector<2x32xf32>
    %296 = arith.mulf %291, %293 : vector<2x32xf32>
    %297 = arith.addf %295, %296 : vector<2x32xf32>
    %298 = math.tanh %297 : vector<2x32xf32>
    %299 = arith.mulf %294, %298 : vector<2x32xf32>
    %300 = arith.truncf %299 : vector<2x32xf32> to vector<2x32xbf16>
    %cst_80 = arith.constant dense<0.000000e+00> : vector<2x128xf32>
    %301 = tpu.matmul %300, %184, %cst_80 {dimension_numbers = #tpu.dot_dimension_numbers<[1], [0], [0], [1], [0, 0, 1, 1], [], []>} : vector<2x32xbf16>, vector<32x128xbf16>, vector<2x128xf32> -> vector<2x128xf32>
    %302 = vector.broadcast %185 : vector<1x128xf32> to vector<2x128xf32>
    %303 = arith.addf %301, %302 : vector<2x128xf32>
    %c3_81 = arith.constant 3 : index
    %c0_82 = arith.constant 0 : index
    %c0_83 = arith.constant 0 : index
    %304 = vector.load %arg9[%c3_81, %c0_82, %c0_83] : memref<8x2x128xf32, #tpu.memory_space<vmem>>, vector<1x2x128xf32>
    %305 = vector.shape_cast %304 : vector<1x2x128xf32> to vector<2x128xf32>
    %306 = vector.shape_cast %303 : vector<2x128xf32> to vector<1x2x128xf32>
    tpu.vector_store %arg9[%c3_81, %c0_82, %c0_83], %306 {strides = array<i32>} : memref<8x2x128xf32, #tpu.memory_space<vmem>>, vector<1x2x128xf32>,
    %cst_84 = arith.constant dense<0xFF800000> : vector<2xf32>
    %307 = vector.multi_reduction <maximumf>, %303, %cst_84 [1] : vector<2x128xf32> to vector<2xf32>
    %308 = vector.shape_cast %307 : vector<2xf32> to vector<2x1xf32>
    %309 = vector.broadcast %308 : vector<2x1xf32> to vector<2x128xf32>
    %310 = arith.cmpf oeq, %303, %309 : vector<2x128xf32>
    %c128_i32_85 = arith.constant 128 : i32
    %311 = vector.broadcast %c128_i32_85 : i32 to vector<2x128xi32>
    %312 = arith.select %310, %180, %311 : vector<2x128xi1>, vector<2x128xi32>
    %cst_86 = arith.constant dense<2147483647> : vector<2xi32>
    %313 = vector.multi_reduction <minsi>, %312, %cst_86 [1] : vector<2x128xi32> to vector<2xi32>
    %314 = vector.shape_cast %313 : vector<2xi32> to vector<2x1xi32>
    %315 = vector.broadcast %314 : vector<2x1xi32> to vector<2x32xi32>
    %316 = arith.cmpi eq, %181, %315 : vector<2x32xi32>
    %317 = arith.extui %316 : vector<2x32xi1> to vector<2x32xi32>
    %318 = arith.sitofp %317 : vector<2x32xi32> to vector<2x32xf32>
    %c3_87 = arith.constant 3 : index
    %319 = memref.load %arg0[%c3_87] : memref<8xi32, #tpu.memory_space<smem>>
    %c0_i32_88 = arith.constant 0 : i32
    %320 = arith.cmpi sgt, %319, %c0_i32_88 : i32
    %c3_89 = arith.constant 3 : index
    %c0_90 = arith.constant 0 : index
    %c0_91 = arith.constant 0 : index
    %321 = vector.load %arg4[%c3_89, %c0_90, %c0_91] : memref<8x2x32xf32, #tpu.memory_space<vmem>>, vector<1x2x32xf32>
    %322 = vector.shape_cast %321 : vector<1x2x32xf32> to vector<2x32xf32>
    %323 = arith.select %320, %322, %318 : vector<2x32xf32>
    %324 = tpu.concatenate %323, %299 in 1 : vector<2x32xf32>, vector<2x32xf32> -> vector<2x64xf32>
    %325 = arith.truncf %324 : vector<2x64xf32> to vector<2x64xbf16>
    %cst_92 = arith.constant dense<0.000000e+00> : vector<2x128xf32>
    %326 = tpu.matmul %325, %182, %cst_92 {dimension_numbers = #tpu.dot_dimension_numbers<[1], [0], [0], [1], [0, 0, 1, 1], [], []>} : vector<2x64xbf16>, vector<64x128xbf16>, vector<2x128xf32> -> vector<2x128xf32>
    %327 = vector.broadcast %183 : vector<1x128xf32> to vector<2x128xf32>
    %328 = arith.addf %326, %327 : vector<2x128xf32>
    %329 = arith.negf %328 : vector<2x128xf32>
    %330 = math.exp %329 : vector<2x128xf32>
    %cst_93 = arith.constant 1.000000e+00 : f32
    %331 = vector.broadcast %cst_93 : f32 to vector<2x128xf32>
    %332 = arith.addf %331, %330 : vector<2x128xf32>
    %333 = arith.divf %331, %332 : vector<2x128xf32>
    %334 = math.tanh %328 : vector<2x128xf32>
    %335 = vector.extract_strided_slice %333 {offsets = [0, 0], sizes = [2, 32], strides = [1, 1]} : vector<2x128xf32> to vector<2x32xf32>
    %336 = vector.extract_strided_slice %333 {offsets = [0, 32], sizes = [2, 32], strides = [1, 1]} : vector<2x128xf32> to vector<2x32xf32>
    %337 = vector.extract_strided_slice %334 {offsets = [0, 64], sizes = [2, 32], strides = [1, 1]} : vector<2x128xf32> to vector<2x32xf32>
    %338 = vector.extract_strided_slice %333 {offsets = [0, 96], sizes = [2, 32], strides = [1, 1]} : vector<2x128xf32> to vector<2x32xf32>
    %339 = arith.mulf %336, %297 : vector<2x32xf32>
    %340 = arith.mulf %335, %337 : vector<2x32xf32>
    %341 = arith.addf %339, %340 : vector<2x32xf32>
    %342 = math.tanh %341 : vector<2x32xf32>
    %343 = arith.mulf %338, %342 : vector<2x32xf32>
    %344 = arith.truncf %343 : vector<2x32xf32> to vector<2x32xbf16>
    %cst_94 = arith.constant dense<0.000000e+00> : vector<2x128xf32>
    %345 = tpu.matmul %344, %184, %cst_94 {dimension_numbers = #tpu.dot_dimension_numbers<[1], [0], [0], [1], [0, 0, 1, 1], [], []>} : vector<2x32xbf16>, vector<32x128xbf16>, vector<2x128xf32> -> vector<2x128xf32>
    %346 = vector.broadcast %185 : vector<1x128xf32> to vector<2x128xf32>
    %347 = arith.addf %345, %346 : vector<2x128xf32>
    %c4_95 = arith.constant 4 : index
    %c0_96 = arith.constant 0 : index
    %c0_97 = arith.constant 0 : index
    %348 = vector.load %arg9[%c4_95, %c0_96, %c0_97] : memref<8x2x128xf32, #tpu.memory_space<vmem>>, vector<1x2x128xf32>
    %349 = vector.shape_cast %348 : vector<1x2x128xf32> to vector<2x128xf32>
    %350 = vector.shape_cast %347 : vector<2x128xf32> to vector<1x2x128xf32>
    tpu.vector_store %arg9[%c4_95, %c0_96, %c0_97], %350 {strides = array<i32>} : memref<8x2x128xf32, #tpu.memory_space<vmem>>, vector<1x2x128xf32>,
    %cst_98 = arith.constant dense<0xFF800000> : vector<2xf32>
    %351 = vector.multi_reduction <maximumf>, %347, %cst_98 [1] : vector<2x128xf32> to vector<2xf32>
    %352 = vector.shape_cast %351 : vector<2xf32> to vector<2x1xf32>
    %353 = vector.broadcast %352 : vector<2x1xf32> to vector<2x128xf32>
    %354 = arith.cmpf oeq, %347, %353 : vector<2x128xf32>
    %c128_i32_99 = arith.constant 128 : i32
    %355 = vector.broadcast %c128_i32_99 : i32 to vector<2x128xi32>
    %356 = arith.select %354, %180, %355 : vector<2x128xi1>, vector<2x128xi32>
    %cst_100 = arith.constant dense<2147483647> : vector<2xi32>
    %357 = vector.multi_reduction <minsi>, %356, %cst_100 [1] : vector<2x128xi32> to vector<2xi32>
    %358 = vector.shape_cast %357 : vector<2xi32> to vector<2x1xi32>
    %359 = vector.broadcast %358 : vector<2x1xi32> to vector<2x32xi32>
    %360 = arith.cmpi eq, %181, %359 : vector<2x32xi32>
    %361 = arith.extui %360 : vector<2x32xi1> to vector<2x32xi32>
    %362 = arith.sitofp %361 : vector<2x32xi32> to vector<2x32xf32>
    %c4_101 = arith.constant 4 : index
    %363 = memref.load %arg0[%c4_101] : memref<8xi32, #tpu.memory_space<smem>>
    %c0_i32_102 = arith.constant 0 : i32
    %364 = arith.cmpi sgt, %363, %c0_i32_102 : i32
    %c4_103 = arith.constant 4 : index
    %c0_104 = arith.constant 0 : index
    %c0_105 = arith.constant 0 : index
    %365 = vector.load %arg4[%c4_103, %c0_104, %c0_105] : memref<8x2x32xf32, #tpu.memory_space<vmem>>, vector<1x2x32xf32>
    %366 = vector.shape_cast %365 : vector<1x2x32xf32> to vector<2x32xf32>
    %367 = arith.select %364, %366, %362 : vector<2x32xf32>
    %368 = tpu.concatenate %367, %343 in 1 : vector<2x32xf32>, vector<2x32xf32> -> vector<2x64xf32>
    %369 = arith.truncf %368 : vector<2x64xf32> to vector<2x64xbf16>
    %cst_106 = arith.constant dense<0.000000e+00> : vector<2x128xf32>
    %370 = tpu.matmul %369, %182, %cst_106 {dimension_numbers = #tpu.dot_dimension_numbers<[1], [0], [0], [1], [0, 0, 1, 1], [], []>} : vector<2x64xbf16>, vector<64x128xbf16>, vector<2x128xf32> -> vector<2x128xf32>
    %371 = vector.broadcast %183 : vector<1x128xf32> to vector<2x128xf32>
    %372 = arith.addf %370, %371 : vector<2x128xf32>
    %373 = arith.negf %372 : vector<2x128xf32>
    %374 = math.exp %373 : vector<2x128xf32>
    %cst_107 = arith.constant 1.000000e+00 : f32
    %375 = vector.broadcast %cst_107 : f32 to vector<2x128xf32>
    %376 = arith.addf %375, %374 : vector<2x128xf32>
    %377 = arith.divf %375, %376 : vector<2x128xf32>
    %378 = math.tanh %372 : vector<2x128xf32>
    %379 = vector.extract_strided_slice %377 {offsets = [0, 0], sizes = [2, 32], strides = [1, 1]} : vector<2x128xf32> to vector<2x32xf32>
    %380 = vector.extract_strided_slice %377 {offsets = [0, 32], sizes = [2, 32], strides = [1, 1]} : vector<2x128xf32> to vector<2x32xf32>
    %381 = vector.extract_strided_slice %378 {offsets = [0, 64], sizes = [2, 32], strides = [1, 1]} : vector<2x128xf32> to vector<2x32xf32>
    %382 = vector.extract_strided_slice %377 {offsets = [0, 96], sizes = [2, 32], strides = [1, 1]} : vector<2x128xf32> to vector<2x32xf32>
    %383 = arith.mulf %380, %341 : vector<2x32xf32>
    %384 = arith.mulf %379, %381 : vector<2x32xf32>
    %385 = arith.addf %383, %384 : vector<2x32xf32>
    %386 = math.tanh %385 : vector<2x32xf32>
    %387 = arith.mulf %382, %386 : vector<2x32xf32>
    %388 = arith.truncf %387 : vector<2x32xf32> to vector<2x32xbf16>
    %cst_108 = arith.constant dense<0.000000e+00> : vector<2x128xf32>
    %389 = tpu.matmul %388, %184, %cst_108 {dimension_numbers = #tpu.dot_dimension_numbers<[1], [0], [0], [1], [0, 0, 1, 1], [], []>} : vector<2x32xbf16>, vector<32x128xbf16>, vector<2x128xf32> -> vector<2x128xf32>
    %390 = vector.broadcast %185 : vector<1x128xf32> to vector<2x128xf32>
    %391 = arith.addf %389, %390 : vector<2x128xf32>
    %c5_109 = arith.constant 5 : index
    %c0_110 = arith.constant 0 : index
    %c0_111 = arith.constant 0 : index
    %392 = vector.load %arg9[%c5_109, %c0_110, %c0_111] : memref<8x2x128xf32, #tpu.memory_space<vmem>>, vector<1x2x128xf32>
    %393 = vector.shape_cast %392 : vector<1x2x128xf32> to vector<2x128xf32>
    %394 = vector.shape_cast %391 : vector<2x128xf32> to vector<1x2x128xf32>
    tpu.vector_store %arg9[%c5_109, %c0_110, %c0_111], %394 {strides = array<i32>} : memref<8x2x128xf32, #tpu.memory_space<vmem>>, vector<1x2x128xf32>,
    %cst_112 = arith.constant dense<0xFF800000> : vector<2xf32>
    %395 = vector.multi_reduction <maximumf>, %391, %cst_112 [1] : vector<2x128xf32> to vector<2xf32>
    %396 = vector.shape_cast %395 : vector<2xf32> to vector<2x1xf32>
    %397 = vector.broadcast %396 : vector<2x1xf32> to vector<2x128xf32>
    %398 = arith.cmpf oeq, %391, %397 : vector<2x128xf32>
    %c128_i32_113 = arith.constant 128 : i32
    %399 = vector.broadcast %c128_i32_113 : i32 to vector<2x128xi32>
    %400 = arith.select %398, %180, %399 : vector<2x128xi1>, vector<2x128xi32>
    %cst_114 = arith.constant dense<2147483647> : vector<2xi32>
    %401 = vector.multi_reduction <minsi>, %400, %cst_114 [1] : vector<2x128xi32> to vector<2xi32>
    %402 = vector.shape_cast %401 : vector<2xi32> to vector<2x1xi32>
    %403 = vector.broadcast %402 : vector<2x1xi32> to vector<2x32xi32>
    %404 = arith.cmpi eq, %181, %403 : vector<2x32xi32>
    %405 = arith.extui %404 : vector<2x32xi1> to vector<2x32xi32>
    %406 = arith.sitofp %405 : vector<2x32xi32> to vector<2x32xf32>
    %c5_115 = arith.constant 5 : index
    %407 = memref.load %arg0[%c5_115] : memref<8xi32, #tpu.memory_space<smem>>
    %c0_i32_116 = arith.constant 0 : i32
    %408 = arith.cmpi sgt, %407, %c0_i32_116 : i32
    %c5_117 = arith.constant 5 : index
    %c0_118 = arith.constant 0 : index
    %c0_119 = arith.constant 0 : index
    %409 = vector.load %arg4[%c5_117, %c0_118, %c0_119] : memref<8x2x32xf32, #tpu.memory_space<vmem>>, vector<1x2x32xf32>
    %410 = vector.shape_cast %409 : vector<1x2x32xf32> to vector<2x32xf32>
    %411 = arith.select %408, %410, %406 : vector<2x32xf32>
    %412 = tpu.concatenate %411, %387 in 1 : vector<2x32xf32>, vector<2x32xf32> -> vector<2x64xf32>
    %413 = arith.truncf %412 : vector<2x64xf32> to vector<2x64xbf16>
    %cst_120 = arith.constant dense<0.000000e+00> : vector<2x128xf32>
    %414 = tpu.matmul %413, %182, %cst_120 {dimension_numbers = #tpu.dot_dimension_numbers<[1], [0], [0], [1], [0, 0, 1, 1], [], []>} : vector<2x64xbf16>, vector<64x128xbf16>, vector<2x128xf32> -> vector<2x128xf32>
    %415 = vector.broadcast %183 : vector<1x128xf32> to vector<2x128xf32>
    %416 = arith.addf %414, %415 : vector<2x128xf32>
    %417 = arith.negf %416 : vector<2x128xf32>
    %418 = math.exp %417 : vector<2x128xf32>
    %cst_121 = arith.constant 1.000000e+00 : f32
    %419 = vector.broadcast %cst_121 : f32 to vector<2x128xf32>
    %420 = arith.addf %419, %418 : vector<2x128xf32>
    %421 = arith.divf %419, %420 : vector<2x128xf32>
    %422 = math.tanh %416 : vector<2x128xf32>
    %423 = vector.extract_strided_slice %421 {offsets = [0, 0], sizes = [2, 32], strides = [1, 1]} : vector<2x128xf32> to vector<2x32xf32>
    %424 = vector.extract_strided_slice %421 {offsets = [0, 32], sizes = [2, 32], strides = [1, 1]} : vector<2x128xf32> to vector<2x32xf32>
    %425 = vector.extract_strided_slice %422 {offsets = [0, 64], sizes = [2, 32], strides = [1, 1]} : vector<2x128xf32> to vector<2x32xf32>
    %426 = vector.extract_strided_slice %421 {offsets = [0, 96], sizes = [2, 32], strides = [1, 1]} : vector<2x128xf32> to vector<2x32xf32>
    %427 = arith.mulf %424, %385 : vector<2x32xf32>
    %428 = arith.mulf %423, %425 : vector<2x32xf32>
    %429 = arith.addf %427, %428 : vector<2x32xf32>
    %430 = math.tanh %429 : vector<2x32xf32>
    %431 = arith.mulf %426, %430 : vector<2x32xf32>
    %432 = arith.truncf %431 : vector<2x32xf32> to vector<2x32xbf16>
    %cst_122 = arith.constant dense<0.000000e+00> : vector<2x128xf32>
    %433 = tpu.matmul %432, %184, %cst_122 {dimension_numbers = #tpu.dot_dimension_numbers<[1], [0], [0], [1], [0, 0, 1, 1], [], []>} : vector<2x32xbf16>, vector<32x128xbf16>, vector<2x128xf32> -> vector<2x128xf32>
    %434 = vector.broadcast %185 : vector<1x128xf32> to vector<2x128xf32>
    %435 = arith.addf %433, %434 : vector<2x128xf32>
    %c6_123 = arith.constant 6 : index
    %c0_124 = arith.constant 0 : index
    %c0_125 = arith.constant 0 : index
    %436 = vector.load %arg9[%c6_123, %c0_124, %c0_125] : memref<8x2x128xf32, #tpu.memory_space<vmem>>, vector<1x2x128xf32>
    %437 = vector.shape_cast %436 : vector<1x2x128xf32> to vector<2x128xf32>
    %438 = vector.shape_cast %435 : vector<2x128xf32> to vector<1x2x128xf32>
    tpu.vector_store %arg9[%c6_123, %c0_124, %c0_125], %438 {strides = array<i32>} : memref<8x2x128xf32, #tpu.memory_space<vmem>>, vector<1x2x128xf32>,
    %cst_126 = arith.constant dense<0xFF800000> : vector<2xf32>
    %439 = vector.multi_reduction <maximumf>, %435, %cst_126 [1] : vector<2x128xf32> to vector<2xf32>
    %440 = vector.shape_cast %439 : vector<2xf32> to vector<2x1xf32>
    %441 = vector.broadcast %440 : vector<2x1xf32> to vector<2x128xf32>
    %442 = arith.cmpf oeq, %435, %441 : vector<2x128xf32>
    %c128_i32_127 = arith.constant 128 : i32
    %443 = vector.broadcast %c128_i32_127 : i32 to vector<2x128xi32>
    %444 = arith.select %442, %180, %443 : vector<2x128xi1>, vector<2x128xi32>
    %cst_128 = arith.constant dense<2147483647> : vector<2xi32>
    %445 = vector.multi_reduction <minsi>, %444, %cst_128 [1] : vector<2x128xi32> to vector<2xi32>
    %446 = vector.shape_cast %445 : vector<2xi32> to vector<2x1xi32>
    %447 = vector.broadcast %446 : vector<2x1xi32> to vector<2x32xi32>
    %448 = arith.cmpi eq, %181, %447 : vector<2x32xi32>
    %449 = arith.extui %448 : vector<2x32xi1> to vector<2x32xi32>
    %450 = arith.sitofp %449 : vector<2x32xi32> to vector<2x32xf32>
    %c6_129 = arith.constant 6 : index
    %451 = memref.load %arg0[%c6_129] : memref<8xi32, #tpu.memory_space<smem>>
    %c0_i32_130 = arith.constant 0 : i32
    %452 = arith.cmpi sgt, %451, %c0_i32_130 : i32
    %c6_131 = arith.constant 6 : index
    %c0_132 = arith.constant 0 : index
    %c0_133 = arith.constant 0 : index
    %453 = vector.load %arg4[%c6_131, %c0_132, %c0_133] : memref<8x2x32xf32, #tpu.memory_space<vmem>>, vector<1x2x32xf32>
    %454 = vector.shape_cast %453 : vector<1x2x32xf32> to vector<2x32xf32>
    %455 = arith.select %452, %454, %450 : vector<2x32xf32>
    %456 = tpu.concatenate %455, %431 in 1 : vector<2x32xf32>, vector<2x32xf32> -> vector<2x64xf32>
    %457 = arith.truncf %456 : vector<2x64xf32> to vector<2x64xbf16>
    %cst_134 = arith.constant dense<0.000000e+00> : vector<2x128xf32>
    %458 = tpu.matmul %457, %182, %cst_134 {dimension_numbers = #tpu.dot_dimension_numbers<[1], [0], [0], [1], [0, 0, 1, 1], [], []>} : vector<2x64xbf16>, vector<64x128xbf16>, vector<2x128xf32> -> vector<2x128xf32>
    %459 = vector.broadcast %183 : vector<1x128xf32> to vector<2x128xf32>
    %460 = arith.addf %458, %459 : vector<2x128xf32>
    %461 = arith.negf %460 : vector<2x128xf32>
    %462 = math.exp %461 : vector<2x128xf32>
    %cst_135 = arith.constant 1.000000e+00 : f32
    %463 = vector.broadcast %cst_135 : f32 to vector<2x128xf32>
    %464 = arith.addf %463, %462 : vector<2x128xf32>
    %465 = arith.divf %463, %464 : vector<2x128xf32>
    %466 = math.tanh %460 : vector<2x128xf32>
    %467 = vector.extract_strided_slice %465 {offsets = [0, 0], sizes = [2, 32], strides = [1, 1]} : vector<2x128xf32> to vector<2x32xf32>
    %468 = vector.extract_strided_slice %465 {offsets = [0, 32], sizes = [2, 32], strides = [1, 1]} : vector<2x128xf32> to vector<2x32xf32>
    %469 = vector.extract_strided_slice %466 {offsets = [0, 64], sizes = [2, 32], strides = [1, 1]} : vector<2x128xf32> to vector<2x32xf32>
    %470 = vector.extract_strided_slice %465 {offsets = [0, 96], sizes = [2, 32], strides = [1, 1]} : vector<2x128xf32> to vector<2x32xf32>
    %471 = arith.mulf %468, %429 : vector<2x32xf32>
    %472 = arith.mulf %467, %469 : vector<2x32xf32>
    %473 = arith.addf %471, %472 : vector<2x32xf32>
    %474 = math.tanh %473 : vector<2x32xf32>
    %475 = arith.mulf %470, %474 : vector<2x32xf32>
    %476 = arith.truncf %475 : vector<2x32xf32> to vector<2x32xbf16>
    %cst_136 = arith.constant dense<0.000000e+00> : vector<2x128xf32>
    %477 = tpu.matmul %476, %184, %cst_136 {dimension_numbers = #tpu.dot_dimension_numbers<[1], [0], [0], [1], [0, 0, 1, 1], [], []>} : vector<2x32xbf16>, vector<32x128xbf16>, vector<2x128xf32> -> vector<2x128xf32>
    %478 = vector.broadcast %185 : vector<1x128xf32> to vector<2x128xf32>
    %479 = arith.addf %477, %478 : vector<2x128xf32>
    %c7_137 = arith.constant 7 : index
    %c0_138 = arith.constant 0 : index
    %c0_139 = arith.constant 0 : index
    %480 = vector.load %arg9[%c7_137, %c0_138, %c0_139] : memref<8x2x128xf32, #tpu.memory_space<vmem>>, vector<1x2x128xf32>
    %481 = vector.shape_cast %480 : vector<1x2x128xf32> to vector<2x128xf32>
    %482 = vector.shape_cast %479 : vector<2x128xf32> to vector<1x2x128xf32>
    tpu.vector_store %arg9[%c7_137, %c0_138, %c0_139], %482 {strides = array<i32>} : memref<8x2x128xf32, #tpu.memory_space<vmem>>, vector<1x2x128xf32>,
    return
  }
}

</mosaic_0001>

<llo_original>
// kernel: seq2seq_forward.1
$region0: #{seq2seq_forward.1}
  #allocation0 [shape = 'u32[]', space=smem, size = 0x4, offset = 0x4, fixed_abs, tag = 'smem constant byte address 0x4 - core index']
  #allocation1 [shape = 'u32[144,128]{1,0:T(1,128)}', space=vmem, size = 0x12000, scoped, tag = 'internal scratch']
  %s0 = inlined_call_operand.vmem [shape: s32[8], index: 0, kind: input, shape index: {}]
  %s1 = inlined_call_operand.vmem [shape: f32[8,2,128], index: 1, kind: input, shape index: {}]
  %s2 = inlined_call_operand.vmem [shape: bf16[32,128], index: 2, kind: input, shape index: {}]
  %s3 = inlined_call_operand.vmem [shape: f32[1,128], index: 3, kind: input, shape index: {}]
  %s4 = inlined_call_operand.vmem [shape: f32[8,2,32], index: 4, kind: input, shape index: {}]
  %s5 = inlined_call_operand.vmem [shape: bf16[64,128], index: 5, kind: input, shape index: {}]
  %s6 = inlined_call_operand.vmem [shape: f32[1,128], index: 6, kind: input, shape index: {}]
  %s7 = inlined_call_operand.vmem [shape: bf16[32,128], index: 7, kind: input, shape index: {}]
  %s8 = inlined_call_operand.vmem [shape: f32[1,128], index: 8, kind: input, shape index: {}]
  %s9 = inlined_call_operand.hbm [shape: f32[8,2,128], index: 9, kind: output, shape index: {}]
  %s10 = sld [smem:[#allocation0]]
  $region50: #{seq2seq_forward.1} parent=0
    _
  %s12 = ssub.s32 1, %s10
  %s13 = scalar_select 0, %s12, %s10
  $region1: #{seq2seq_forward.1} parent=0
    #allocation2 [shape = 'u8[512]{0}', space=smem, size = 0x200, scoped, tag = 'input window, operand 0, single buffered']
    #allocation3 [shape = 's32[1]{0}', space=sflag, size = 0x4, scoped, tag = 'scoped memory for seq2seq_forward.1']
    #allocation4 [shape = 's32[1]{0}', space=sflag, size = 0x4, scoped, tag = 'scoped memory for seq2seq_forward.1']
    #allocation5 [shape = 'u8[8192]{0}', space=vmem, size = 0x2000, scoped, tag = 'output window, operand 0, single buffered']
    %14 = vsyncpa [#allocation4], 0
    %15 = vsyncpa [#allocation3], 0
    // Predicated region
    $region2: #{seq2seq_forward.1} parent=1 // pred_check
      _
    $region3: #{seq2seq_forward.1} parent=1 // pred_check_branch
      %17 = sbr.rel (0) target = $region5
    $region4: #{seq2seq_forward.1} parent=1 // pred_region
      %s19 = ssub.s32 16, 16
      %20 = vsyncadd [#allocation4], %s19
      %s22 = sshll.u32 %s0, 4
      %s23 = int_to_ptr.vmem [resolvable:$true] %s22
      %25 = dma.vmem_to_smem %s23, 16, [#allocation2], [#allocation4]
    $region5: #{seq2seq_forward.1} parent=1 // pred_fallthru
      _
    // Predicated region
    $region6: #{seq2seq_forward.1} parent=1 // pred_check
      _
    $region7: #{seq2seq_forward.1} parent=1 // pred_check_branch
      %27 = sbr.rel (0) target = $region9
    $region8: #{seq2seq_forward.1} parent=1 // pred_region
      _
    $region9: #{seq2seq_forward.1} parent=1 // pred_fallthru
      _
    // Predicated region
    $region10: #{seq2seq_forward.1} parent=1 // pred_check
      _
    $region11: #{seq2seq_forward.1} parent=1 // pred_check_branch
      %29 = sbr.rel (0) target = $region13
    $region12: #{seq2seq_forward.1} parent=1 // pred_region
      _
    $region13: #{seq2seq_forward.1} parent=1 // pred_fallthru
      _
    // Predicated region
    $region14: #{seq2seq_forward.1} parent=1 // pred_check
      _
    $region15: #{seq2seq_forward.1} parent=1 // pred_check_branch
      %31 = sbr.rel (0) target = $region17
    $region16: #{seq2seq_forward.1} parent=1 // pred_region
      _
    $region17: #{seq2seq_forward.1} parent=1 // pred_fallthru
      _
    // Predicated region
    $region18: #{seq2seq_forward.1} parent=1 // pred_check
      _
    $region19: #{seq2seq_forward.1} parent=1 // pred_check_branch
      %33 = sbr.rel (0) target = $region21
    $region20: #{seq2seq_forward.1} parent=1 // pred_region
      _
    $region21: #{seq2seq_forward.1} parent=1 // pred_fallthru
      _
    // Predicated region
    $region22: #{seq2seq_forward.1} parent=1 // pred_check
      _
    $region23: #{seq2seq_forward.1} parent=1 // pred_check_branch
      %35 = sbr.rel (0) target = $region25
    $region24: #{seq2seq_forward.1} parent=1 // pred_region
      _
    $region25: #{seq2seq_forward.1} parent=1 // pred_fallthru
      _
    // Predicated region
    $region26: #{seq2seq_forward.1} parent=1 // pred_check
      _
    $region27: #{seq2seq_forward.1} parent=1 // pred_check_branch
      %37 = sbr.rel (0) target = $region29
    $region28: #{seq2seq_forward.1} parent=1 // pred_region
      _
    $region29: #{seq2seq_forward.1} parent=1 // pred_fallthru
      _
    // Predicated region
    $region30: #{seq2seq_forward.1} parent=1 // pred_check
      _
    $region31: #{seq2seq_forward.1} parent=1 // pred_check_branch
      %39 = sbr.rel (0) target = $region33
    $region32: #{seq2seq_forward.1} parent=1 // pred_region
      _
    $region33: #{seq2seq_forward.1} parent=1 // pred_fallthru
      _
    // Predicated region
    $region34: #{seq2seq_forward.1} parent=1 // pred_check
      _
    $region35: #{seq2seq_forward.1} parent=1 // pred_check_branch
      %41 = sbr.rel (0) target = $region37
    $region36: #{seq2seq_forward.1} parent=1 // pred_region
      _
    $region37: #{seq2seq_forward.1} parent=1 // pred_fallthru
      _
    // Predicated region
    $region38: #{seq2seq_forward.1} parent=1 // pred_check
      _
    $region39: #{seq2seq_forward.1} parent=1 // pred_check_branch
      %43 = sbr.rel (0) target = $region41
    $region40: #{seq2seq_forward.1} parent=1 // pred_region
      %44 = dma.done [#allocation4], 16
    $region41: #{seq2seq_forward.1} parent=1 // pred_fallthru
      _
    %45 = sfence
    %v47 = vld [vmem:[%s2] sm:$0xf]
    %v48 = vld [vmem:[%s2 + $0x4] sm:$0xf]
    %v49 = vld [vmem:[%s2 + $0x8] sm:$0xf]
    %v50 = vld [vmem:[%s2 + $0xc] sm:$0xf]
    %v51 = vld [vmem:[%s3] sm:$0x1]
    %v52 = vld [vmem:[%s1] sm:$0x3]
    %v57 = vunpack.c.l.b16 %v47
    %v58 = vunpack.c.l.b16 %v48
    %v59 = vunpack.c.l.b16 %v49
    %v60 = vunpack.c.l.b16 %v50
    %v61 = vpack.c.b16 %v58, %v57
    %v62 = vpack.c.b16 %v60, %v59
    %vm65 = vcmask 261120
    %v67 = vsel %vm65, 0, 0
    %69 = vmatprep.subr.bf16.mxu0 0
    %70 = vmatpush1.bf16.msra.mxu0 %v61
    %71 = vmatprep.subr.bf16.mxu0 0
    %72 = vmatpush1.bf16.msra.mxu0 %v62
    %73 = vmatprep.subr.bf16.mxu0 0
    %74 = vmatpush1.bf16.msra.mxu0 0
    %75 = vmatprep.subr.bf16.mxu0 0
    %76 = vmatpush1.bf16.msra.mxu0 0
    %77 = vmatprep.subr.bf16.mxu0 0
    %78 = vmatpush1.bf16.msra.mxu0 0
    %79 = vmatprep.subr.bf16.mxu0 0
    %80 = vmatpush1.bf16.msra.mxu0 0
    %81 = vmatprep.subr.bf16.mxu0 0
    %82 = vmatpush1.bf16.msra.mxu0 0
    %83 = vmatprep.subr.bf16.mxu0 0
    %84 = vmatpush1.bf16.msra.mxu0 0
    %85 = vmatprep.subr.bf16.mxu0 0
    %86 = vmatpush1.bf16.msra.mxu0 0
    %87 = vmatprep.subr.bf16.mxu0 0
    %88 = vmatpush1.bf16.msra.mxu0 0
    %89 = vmatprep.subr.bf16.mxu0 0
    %90 = vmatpush1.bf16.msra.mxu0 0
    %91 = vmatprep.subr.bf16.mxu0 0
    %92 = vmatpush1.bf16.msra.mxu0 0
    %93 = vmatprep.subr.bf16.mxu0 0
    %94 = vmatpush1.bf16.msra.mxu0 0
    %95 = vmatprep.subr.bf16.mxu0 0
    %96 = vmatpush1.bf16.msra.mxu0 0
    %97 = vmatprep.subr.bf16.mxu0 0
    %98 = vmatpush1.bf16.msra.mxu0 0
    %99 = vmatprep.subr.bf16.mxu0 0
    %100 = vmatpush1.bf16.msra.mxu0 0
    %101 = vmatprep.mubr.bf16.mxu0 0
    %102 = vmatmul.mubr.bf16.gmra.mrb[0].mxu0 %v67
    %v103 = vpop.f32.mrb[0].mxu0
    %v104 = vadd.f32 0.0, %v103
    %v105 = vpop.f32.mrb[0].mxu0
    %v106 = vpop.f32.mrb[0].mxu0
    %v107 = vpop.f32.mrb[0].mxu0
    %108 = vdwg.mxu0
    %v109 = vadd.f32 %v52, %v104
    %v111 = vlaneseq
    %v112 = vshrl.u32 %v111, 7
    %v113 = vsub.s32 0, %v112
    %v114 = vrot.slane %v51, %v113
    %v116 = vadd.f32 %v109, %v114
    %v117 = vxor.u32 %v116, 2147483648
    %v118 = vmul.f32 %v117, 1.442695
    %v119 = vpow.pop %v118
    %v120 = vadd.f32 %v119, 1.0
    %v121 = vrcp.pop %v120
    %v122 = vmul.f32 1.0, %v121
    %v123 = vtanh.pop %v116
    %v124 = vmul.f32 %v122, 0.0
    %126 = vrot.lane.b32.xlu0 %v123, 64
    %v127 = vpop.permute.xlu0 %126
    %v129 = vmul.f32 %v122, %v127
    %131 = vrot.lane.b32.xlu0 %v129, 32
    %v132 = vpop.permute.xlu0 %131
    %v134 = vadd.f32 %v124, %v132
    %v135 = vtanh.pop %v134
    %137 = vrot.lane.b32.xlu0 %v135, 64
    %v138 = vpop.permute.xlu0 %137
    %v140 = vmul.f32 %v122, %v138
    %s141 = scalar_lea.vmem %s1, 2
    %v142 = vld [vmem:[%s141] sm:$0x3]
    %v143 = vpack.c.bf16 %v140, %v140
    %145 = vrot.lane.b32.xlu0 %v143, 32
    %v146 = vpop.permute.xlu0 %145
    %v148 = vsel %vm65, %v146, 0
    %150 = vmatprep.subr.bf16.mxu0 0
    %151 = vmatpush1.bf16.msra.mxu0 %v61
    %152 = vmatprep.subr.bf16.mxu0 0
    %153 = vmatpush1.bf16.msra.mxu0 %v62
    %154 = vmatprep.subr.bf16.mxu0 0
    %155 = vmatpush1.bf16.msra.mxu0 0
    %156 = vmatprep.subr.bf16.mxu0 0
    %157 = vmatpush1.bf16.msra.mxu0 0
    %158 = vmatprep.subr.bf16.mxu0 0
    %159 = vmatpush1.bf16.msra.mxu0 0
    %160 = vmatprep.subr.bf16.mxu0 0
    %161 = vmatpush1.bf16.msra.mxu0 0
    %162 = vmatprep.subr.bf16.mxu0 0
    %163 = vmatpush1.bf16.msra.mxu0 0
    %164 = vmatprep.subr.bf16.mxu0 0
    %165 = vmatpush1.bf16.msra.mxu0 0
    %166 = vmatprep.subr.bf16.mxu0 0
    %167 = vmatpush1.bf16.msra.mxu0 0
    %168 = vmatprep.subr.bf16.mxu0 0
    %169 = vmatpush1.bf16.msra.mxu0 0
    %170 = vmatprep.subr.bf16.mxu0 0
    %171 = vmatpush1.bf16.msra.mxu0 0
    %172 = vmatprep.subr.bf16.mxu0 0
    %173 = vmatpush1.bf16.msra.mxu0 0
    %174 = vmatprep.subr.bf16.mxu0 0
    %175 = vmatpush1.bf16.msra.mxu0 0
    %176 = vmatprep.subr.bf16.mxu0 0
    %177 = vmatpush1.bf16.msra.mxu0 0
    %178 = vmatprep.subr.bf16.mxu0 0
    %179 = vmatpush1.bf16.msra.mxu0 0
    %180 = vmatprep.subr.bf16.mxu0 0
    %181 = vmatpush1.bf16.msra.mxu0 0
    %182 = vmatprep.mubr.bf16.mxu0 0
    %183 = vmatmul.mubr.bf16.gmra.mrb[0].mxu0 %v148
    %v184 = vpop.f32.mrb[0].mxu0
    %v185 = vadd.f32 0.0, %v184
    %v186 = vpop.f32.mrb[0].mxu0
    %v187 = vpop.f32.mrb[0].mxu0
    %v188 = vpop.f32.mrb[0].mxu0
    %189 = vdwg.mxu0
    %v190 = vadd.f32 %v142, %v185
    %v191 = vadd.f32 %v190, %v114
    %v192 = vxor.u32 %v191, 2147483648
    %v193 = vmul.f32 %v192, 1.442695
    %v194 = vpow.pop %v193
    %v195 = vadd.f32 %v194, 1.0
    %v196 = vrcp.pop %v195
    %v197 = vmul.f32 1.0, %v196
    %v198 = vtanh.pop %v191
    %v199 = vmul.f32 %v197, %v134
    %201 = vrot.lane.b32.xlu0 %v198, 64
    %v202 = vpop.permute.xlu0 %201
    %v204 = vmul.f32 %v197, %v202
    %206 = vrot.lane.b32.xlu0 %v204, 32
    %v207 = vpop.permute.xlu0 %206
    %v209 = vadd.f32 %v199, %v207
    %v210 = vtanh.pop %v209
    %212 = vrot.lane.b32.xlu0 %v210, 64
    %v213 = vpop.permute.xlu0 %212
    %v215 = vmul.f32 %v197, %v213
    %s216 = scalar_lea.vmem %s1, 4
    %v217 = vld [vmem:[%s216] sm:$0x3]
    %v218 = vpack.c.bf16 %v215, %v215
    %220 = vrot.lane.b32.xlu0 %v218, 32
    %v221 = vpop.permute.xlu0 %220
    %v223 = vsel %vm65, %v221, 0
    %225 = vmatprep.subr.bf16.mxu0 0
    %226 = vmatpush1.bf16.msra.mxu0 %v61
    %227 = vmatprep.subr.bf16.mxu0 0
    %228 = vmatpush1.bf16.msra.mxu0 %v62
    %229 = vmatprep.subr.bf16.mxu0 0
    %230 = vmatpush1.bf16.msra.mxu0 0
    %231 = vmatprep.subr.bf16.mxu0 0
    %232 = vmatpush1.bf16.msra.mxu0 0
    %233 = vmatprep.subr.bf16.mxu0 0
    %234 = vmatpush1.bf16.msra.mxu0 0
    %235 = vmatprep.subr.bf16.mxu0 0
    %236 = vmatpush1.bf16.msra.mxu0 0
    %237 = vmatprep.subr.bf16.mxu0 0
    %238 = vmatpush1.bf16.msra.mxu0 0
    %239 = vmatprep.subr.bf16.mxu0 0
    %240 = vmatpush1.bf16.msra.mxu0 0
    %241 = vmatprep.subr.bf16.mxu0 0
    %242 = vmatpush1.bf16.msra.mxu0 0
    %243 = vmatprep.subr.bf16.mxu0 0
    %244 = vmatpush1.bf16.msra.mxu0 0
    %245 = vmatprep.subr.bf16.mxu0 0
    %246 = vmatpush1.bf16.msra.mxu0 0
    %247 = vmatprep.subr.bf16.mxu0 0
    %248 = vmatpush1.bf16.msra.mxu0 0
    %249 = vmatprep.subr.bf16.mxu0 0
    %250 = vmatpush1.bf16.msra.mxu0 0
    %251 = vmatprep.subr.bf16.mxu0 0
    %252 = vmatpush1.bf16.msra.mxu0 0
    %253 = vmatprep.subr.bf16.mxu0 0
    %254 = vmatpush1.bf16.msra.mxu0 0
    %255 = vmatprep.subr.bf16.mxu0 0
    %256 = vmatpush1.bf16.msra.mxu0 0
    %257 = vmatprep.mubr.bf16.mxu0 0
    %258 = vmatmul.mubr.bf16.gmra.mrb[0].mxu0 %v223
    %v259 = vpop.f32.mrb[0].mxu0
    %v260 = vadd.f32 0.0, %v259
    %v261 = vpop.f32.mrb[0].mxu0
    %v262 = vpop.f32.mrb[0].mxu0
    %v263 = vpop.f32.mrb[0].mxu0
    %264 = vdwg.mxu0
    %v265 = vadd.f32 %v217, %v260
    %v266 = vadd.f32 %v265, %v114
    %v267 = vxor.u32 %v266, 2147483648
    %v268 = vmul.f32 %v267, 1.442695
    %v269 = vpow.pop %v268
    %v270 = vadd.f32 %v269, 1.0
    %v271 = vrcp.pop %v270
    %v272 = vmul.f32 1.0, %v271
    %v273 = vtanh.pop %v266
    %v274 = vmul.f32 %v272, %v209
    %276 = vrot.lane.b32.xlu0 %v273, 64
    %v277 = vpop.permute.xlu0 %276
    %v279 = vmul.f32 %v272, %v277
    %281 = vrot.lane.b32.xlu0 %v279, 32
    %v282 = vpop.permute.xlu0 %281
    %v284 = vadd.f32 %v274, %v282
    %v285 = vtanh.pop %v284
    %287 = vrot.lane.b32.xlu0 %v285, 64
    %v288 = vpop.permute.xlu0 %287
    %v290 = vmul.f32 %v272, %v288
    %s291 = scalar_lea.vmem %s1, 6
    %v292 = vld [vmem:[%s291] sm:$0x3]
    %v293 = vpack.c.bf16 %v290, %v290
    %295 = vrot.lane.b32.xlu0 %v293, 32
    %v296 = vpop.permute.xlu0 %295
    %v298 = vsel %vm65, %v296, 0
    %300 = vmatprep.subr.bf16.mxu0 0
    %301 = vmatpush1.bf16.msra.mxu0 %v61
    %302 = vmatprep.subr.bf16.mxu0 0
    %303 = vmatpush1.bf16.msra.mxu0 %v62
    %304 = vmatprep.subr.bf16.mxu0 0
    %305 = vmatpush1.bf16.msra.mxu0 0
    %306 = vmatprep.subr.bf16.mxu0 0
    %307 = vmatpush1.bf16.msra.mxu0 0
    %308 = vmatprep.subr.bf16.mxu0 0
    %309 = vmatpush1.bf16.msra.mxu0 0
    %310 = vmatprep.subr.bf16.mxu0 0
    %311 = vmatpush1.bf16.msra.mxu0 0
    %312 = vmatprep.subr.bf16.mxu0 0
    %313 = vmatpush1.bf16.msra.mxu0 0
    %314 = vmatprep.subr.bf16.mxu0 0
    %315 = vmatpush1.bf16.msra.mxu0 0
    %316 = vmatprep.subr.bf16.mxu0 0
    %317 = vmatpush1.bf16.msra.mxu0 0
    %318 = vmatprep.subr.bf16.mxu0 0
    %319 = vmatpush1.bf16.msra.mxu0 0
    %320 = vmatprep.subr.bf16.mxu0 0
    %321 = vmatpush1.bf16.msra.mxu0 0
    %322 = vmatprep.subr.bf16.mxu0 0
    %323 = vmatpush1.bf16.msra.mxu0 0
    %324 = vmatprep.subr.bf16.mxu0 0
    %325 = vmatpush1.bf16.msra.mxu0 0
    %326 = vmatprep.subr.bf16.mxu0 0
    %327 = vmatpush1.bf16.msra.mxu0 0
    %328 = vmatprep.subr.bf16.mxu0 0
    %329 = vmatpush1.bf16.msra.mxu0 0
    %330 = vmatprep.subr.bf16.mxu0 0
    %331 = vmatpush1.bf16.msra.mxu0 0
    %332 = vmatprep.mubr.bf16.mxu0 0
    %333 = vmatmul.mubr.bf16.gmra.mrb[0].mxu0 %v298
    %v334 = vpop.f32.mrb[0].mxu0
    %v335 = vadd.f32 0.0, %v334
    %v336 = vpop.f32.mrb[0].mxu0
    %v337 = vpop.f32.mrb[0].mxu0
    %v338 = vpop.f32.mrb[0].mxu0
    %339 = vdwg.mxu0
    %v340 = vadd.f32 %v292, %v335
    %v341 = vadd.f32 %v340, %v114
    %v342 = vxor.u32 %v341, 2147483648
    %v343 = vmul.f32 %v342, 1.442695
    %v344 = vpow.pop %v343
    %v345 = vadd.f32 %v344, 1.0
    %v346 = vrcp.pop %v345
    %v347 = vmul.f32 1.0, %v346
    %v348 = vtanh.pop %v341
    %v349 = vmul.f32 %v347, %v284
    %351 = vrot.lane.b32.xlu0 %v348, 64
    %v352 = vpop.permute.xlu0 %351
    %v354 = vmul.f32 %v347, %v352
    %356 = vrot.lane.b32.xlu0 %v354, 32
    %v357 = vpop.permute.xlu0 %356
    %v359 = vadd.f32 %v349, %v357
    %v360 = vtanh.pop %v359
    %362 = vrot.lane.b32.xlu0 %v360, 64
    %v363 = vpop.permute.xlu0 %362
    %v365 = vmul.f32 %v347, %v363
    %s366 = scalar_lea.vmem %s1, 8
    %v367 = vld [vmem:[%s366] sm:$0x3]
    %v368 = vpack.c.bf16 %v365, %v365
    %370 = vrot.lane.b32.xlu0 %v368, 32
    %v371 = vpop.permute.xlu0 %370
    %v373 = vsel %vm65, %v371, 0
    %375 = vmatprep.subr.bf16.mxu0 0
    %376 = vmatpush1.bf16.msra.mxu0 %v61
    %377 = vmatprep.subr.bf16.mxu0 0
    %378 = vmatpush1.bf16.msra.mxu0 %v62
    %379 = vmatprep.subr.bf16.mxu0 0
    %380 = vmatpush1.bf16.msra.mxu0 0
    %381 = vmatprep.subr.bf16.mxu0 0
    %382 = vmatpush1.bf16.msra.mxu0 0
    %383 = vmatprep.subr.bf16.mxu0 0
    %384 = vmatpush1.bf16.msra.mxu0 0
    %385 = vmatprep.subr.bf16.mxu0 0
    %386 = vmatpush1.bf16.msra.mxu0 0
    %387 = vmatprep.subr.bf16.mxu0 0
    %388 = vmatpush1.bf16.msra.mxu0 0
    %389 = vmatprep.subr.bf16.mxu0 0
    %390 = vmatpush1.bf16.msra.mxu0 0
    %391 = vmatprep.subr.bf16.mxu0 0
    %392 = vmatpush1.bf16.msra.mxu0 0
    %393 = vmatprep.subr.bf16.mxu0 0
    %394 = vmatpush1.bf16.msra.mxu0 0
    %395 = vmatprep.subr.bf16.mxu0 0
    %396 = vmatpush1.bf16.msra.mxu0 0
    %397 = vmatprep.subr.bf16.mxu0 0
    %398 = vmatpush1.bf16.msra.mxu0 0
    %399 = vmatprep.subr.bf16.mxu0 0
    %400 = vmatpush1.bf16.msra.mxu0 0
    %401 = vmatprep.subr.bf16.mxu0 0
    %402 = vmatpush1.bf16.msra.mxu0 0
    %403 = vmatprep.subr.bf16.mxu0 0
    %404 = vmatpush1.bf16.msra.mxu0 0
    %405 = vmatprep.subr.bf16.mxu0 0
    %406 = vmatpush1.bf16.msra.mxu0 0
    %407 = vmatprep.mubr.bf16.mxu0 0
    %408 = vmatmul.mubr.bf16.gmra.mrb[0].mxu0 %v373
    %v409 = vpop.f32.mrb[0].mxu0
    %v410 = vadd.f32 0.0, %v409
    %v411 = vpop.f32.mrb[0].mxu0
    %v412 = vpop.f32.mrb[0].mxu0
    %v413 = vpop.f32.mrb[0].mxu0
    %414 = vdwg.mxu0
    %v415 = vadd.f32 %v367, %v410
    %v416 = vadd.f32 %v415, %v114
    %v417 = vxor.u32 %v416, 2147483648
    %v418 = vmul.f32 %v417, 1.442695
    %v419 = vpow.pop %v418
    %v420 = vadd.f32 %v419, 1.0
    %v421 = vrcp.pop %v420
    %v422 = vmul.f32 1.0, %v421
    %v423 = vtanh.pop %v416
    %v424 = vmul.f32 %v422, %v359
    %426 = vrot.lane.b32.xlu0 %v423, 64
    %v427 = vpop.permute.xlu0 %426
    %v429 = vmul.f32 %v422, %v427
    %431 = vrot.lane.b32.xlu0 %v429, 32
    %v432 = vpop.permute.xlu0 %431
    %v434 = vadd.f32 %v424, %v432
    %v435 = vtanh.pop %v434
    %437 = vrot.lane.b32.xlu0 %v435, 64
    %v438 = vpop.permute.xlu0 %437
    %v440 = vmul.f32 %v422, %v438
    %s441 = scalar_lea.vmem %s1, 10
    %v442 = vld [vmem:[%s441] sm:$0x3]
    %v443 = vpack.c.bf16 %v440, %v440
    %445 = vrot.lane.b32.xlu0 %v443, 32
    %v446 = vpop.permute.xlu0 %445
    %v448 = vsel %vm65, %v446, 0
    %450 = vmatprep.subr.bf16.mxu0 0
    %451 = vmatpush1.bf16.msra.mxu0 %v61
    %452 = vmatprep.subr.bf16.mxu0 0
    %453 = vmatpush1.bf16.msra.mxu0 %v62
    %454 = vmatprep.subr.bf16.mxu0 0
    %455 = vmatpush1.bf16.msra.mxu0 0
    %456 = vmatprep.subr.bf16.mxu0 0
    %457 = vmatpush1.bf16.msra.mxu0 0
    %458 = vmatprep.subr.bf16.mxu0 0
    %459 = vmatpush1.bf16.msra.mxu0 0
    %460 = vmatprep.subr.bf16.mxu0 0
    %461 = vmatpush1.bf16.msra.mxu0 0
    %462 = vmatprep.subr.bf16.mxu0 0
    %463 = vmatpush1.bf16.msra.mxu0 0
    %464 = vmatprep.subr.bf16.mxu0 0
    %465 = vmatpush1.bf16.msra.mxu0 0
    %466 = vmatprep.subr.bf16.mxu0 0
    %467 = vmatpush1.bf16.msra.mxu0 0
    %468 = vmatprep.subr.bf16.mxu0 0
    %469 = vmatpush1.bf16.msra.mxu0 0
    %470 = vmatprep.subr.bf16.mxu0 0
    %471 = vmatpush1.bf16.msra.mxu0 0
    %472 = vmatprep.subr.bf16.mxu0 0
    %473 = vmatpush1.bf16.msra.mxu0 0
    %474 = vmatprep.subr.bf16.mxu0 0
    %475 = vmatpush1.bf16.msra.mxu0 0
    %476 = vmatprep.subr.bf16.mxu0 0
    %477 = vmatpush1.bf16.msra.mxu0 0
    %478 = vmatprep.subr.bf16.mxu0 0
    %479 = vmatpush1.bf16.msra.mxu0 0
    %480 = vmatprep.subr.bf16.mxu0 0
    %481 = vmatpush1.bf16.msra.mxu0 0
    %482 = vmatprep.mubr.bf16.mxu0 0
    %483 = vmatmul.mubr.bf16.gmra.mrb[0].mxu0 %v448
    %v484 = vpop.f32.mrb[0].mxu0
    %v485 = vadd.f32 0.0, %v484
    %v486 = vpop.f32.mrb[0].mxu0
    %v487 = vpop.f32.mrb[0].mxu0
    %v488 = vpop.f32.mrb[0].mxu0
    %489 = vdwg.mxu0
    %v490 = vadd.f32 %v442, %v485
    %v491 = vadd.f32 %v490, %v114
    %v492 = vxor.u32 %v491, 2147483648
    %v493 = vmul.f32 %v492, 1.442695
    %v494 = vpow.pop %v493
    %v495 = vadd.f32 %v494, 1.0
    %v496 = vrcp.pop %v495
    %v497 = vmul.f32 1.0, %v496
    %v498 = vtanh.pop %v491
    %v499 = vmul.f32 %v497, %v434
    %501 = vrot.lane.b32.xlu0 %v498, 64
    %v502 = vpop.permute.xlu0 %501
    %v504 = vmul.f32 %v497, %v502
    %506 = vrot.lane.b32.xlu0 %v504, 32
    %v507 = vpop.permute.xlu0 %506
    %v509 = vadd.f32 %v499, %v507
    %v510 = vtanh.pop %v509
    %512 = vrot.lane.b32.xlu0 %v510, 64
    %v513 = vpop.permute.xlu0 %512
    %v515 = vmul.f32 %v497, %v513
    %s516 = scalar_lea.vmem %s1, 12
    %v517 = vld [vmem:[%s516] sm:$0x3]
    %v518 = vpack.c.bf16 %v515, %v515
    %520 = vrot.lane.b32.xlu0 %v518, 32
    %v521 = vpop.permute.xlu0 %520
    %v523 = vsel %vm65, %v521, 0
    %525 = vmatprep.subr.bf16.mxu0 0
    %526 = vmatpush1.bf16.msra.mxu0 %v61
    %527 = vmatprep.subr.bf16.mxu0 0
    %528 = vmatpush1.bf16.msra.mxu0 %v62
    %529 = vmatprep.subr.bf16.mxu0 0
    %530 = vmatpush1.bf16.msra.mxu0 0
    %531 = vmatprep.subr.bf16.mxu0 0
    %532 = vmatpush1.bf16.msra.mxu0 0
    %533 = vmatprep.subr.bf16.mxu0 0
    %534 = vmatpush1.bf16.msra.mxu0 0
    %535 = vmatprep.subr.bf16.mxu0 0
    %536 = vmatpush1.bf16.msra.mxu0 0
    %537 = vmatprep.subr.bf16.mxu0 0
    %538 = vmatpush1.bf16.msra.mxu0 0
    %539 = vmatprep.subr.bf16.mxu0 0
    %540 = vmatpush1.bf16.msra.mxu0 0
    %541 = vmatprep.subr.bf16.mxu0 0
    %542 = vmatpush1.bf16.msra.mxu0 0
    %543 = vmatprep.subr.bf16.mxu0 0
    %544 = vmatpush1.bf16.msra.mxu0 0
    %545 = vmatprep.subr.bf16.mxu0 0
    %546 = vmatpush1.bf16.msra.mxu0 0
    %547 = vmatprep.subr.bf16.mxu0 0
    %548 = vmatpush1.bf16.msra.mxu0 0
    %549 = vmatprep.subr.bf16.mxu0 0
    %550 = vmatpush1.bf16.msra.mxu0 0
    %551 = vmatprep.subr.bf16.mxu0 0
    %552 = vmatpush1.bf16.msra.mxu0 0
    %553 = vmatprep.subr.bf16.mxu0 0
    %554 = vmatpush1.bf16.msra.mxu0 0
    %555 = vmatprep.subr.bf16.mxu0 0
    %556 = vmatpush1.bf16.msra.mxu0 0
    %557 = vmatprep.mubr.bf16.mxu0 0
    %558 = vmatmul.mubr.bf16.gmra.mrb[0].mxu0 %v523
    %v559 = vpop.f32.mrb[0].mxu0
    %v560 = vadd.f32 0.0, %v559
    %v561 = vpop.f32.mrb[0].mxu0
    %v562 = vpop.f32.mrb[0].mxu0
    %v563 = vpop.f32.mrb[0].mxu0
    %564 = vdwg.mxu0
    %v565 = vadd.f32 %v517, %v560
    %v566 = vadd.f32 %v565, %v114
    %v567 = vxor.u32 %v566, 2147483648
    %v568 = vmul.f32 %v567, 1.442695
    %v569 = vpow.pop %v568
    %v570 = vadd.f32 %v569, 1.0
    %v571 = vrcp.pop %v570
    %v572 = vmul.f32 1.0, %v571
    %v573 = vtanh.pop %v566
    %v574 = vmul.f32 %v572, %v509
    %576 = vrot.lane.b32.xlu0 %v573, 64
    %v577 = vpop.permute.xlu0 %576
    %v579 = vmul.f32 %v572, %v577
    %581 = vrot.lane.b32.xlu0 %v579, 32
    %v582 = vpop.permute.xlu0 %581
    %v584 = vadd.f32 %v574, %v582
    %v585 = vtanh.pop %v584
    %587 = vrot.lane.b32.xlu0 %v585, 64
    %v588 = vpop.permute.xlu0 %587
    %v590 = vmul.f32 %v572, %v588
    %s591 = scalar_lea.vmem %s1, 14
    %v592 = vld [vmem:[%s591] sm:$0x3]
    %v593 = vpack.c.bf16 %v590, %v590
    %595 = vrot.lane.b32.xlu0 %v593, 32
    %v596 = vpop.permute.xlu0 %595
    %v598 = vsel %vm65, %v596, 0
    %600 = vmatprep.subr.bf16.mxu0 0
    %601 = vmatpush1.bf16.msra.mxu0 %v61
    %602 = vmatprep.subr.bf16.mxu0 0
    %603 = vmatpush1.bf16.msra.mxu0 %v62
    %604 = vmatprep.subr.bf16.mxu0 0
    %605 = vmatpush1.bf16.msra.mxu0 0
    %606 = vmatprep.subr.bf16.mxu0 0
    %607 = vmatpush1.bf16.msra.mxu0 0
    %608 = vmatprep.subr.bf16.mxu0 0
    %609 = vmatpush1.bf16.msra.mxu0 0
    %610 = vmatprep.subr.bf16.mxu0 0
    %611 = vmatpush1.bf16.msra.mxu0 0
    %612 = vmatprep.subr.bf16.mxu0 0
    %613 = vmatpush1.bf16.msra.mxu0 0
    %614 = vmatprep.subr.bf16.mxu0 0
    %615 = vmatpush1.bf16.msra.mxu0 0
    %616 = vmatprep.subr.bf16.mxu0 0
    %617 = vmatpush1.bf16.msra.mxu0 0
    %618 = vmatprep.subr.bf16.mxu0 0
    %619 = vmatpush1.bf16.msra.mxu0 0
    %620 = vmatprep.subr.bf16.mxu0 0
    %621 = vmatpush1.bf16.msra.mxu0 0
    %622 = vmatprep.subr.bf16.mxu0 0
    %623 = vmatpush1.bf16.msra.mxu0 0
    %624 = vmatprep.subr.bf16.mxu0 0
    %625 = vmatpush1.bf16.msra.mxu0 0
    %626 = vmatprep.subr.bf16.mxu0 0
    %627 = vmatpush1.bf16.msra.mxu0 0
    %628 = vmatprep.subr.bf16.mxu0 0
    %629 = vmatpush1.bf16.msra.mxu0 0
    %630 = vmatprep.subr.bf16.mxu0 0
    %631 = vmatpush1.bf16.msra.mxu0 0
    %632 = vmatprep.mubr.bf16.mxu0 0
    %633 = vmatmul.mubr.bf16.gmra.mrb[0].mxu0 %v598
    %v634 = vpop.f32.mrb[0].mxu0
    %v635 = vadd.f32 0.0, %v634
    %v636 = vpop.f32.mrb[0].mxu0
    %v637 = vpop.f32.mrb[0].mxu0
    %v638 = vpop.f32.mrb[0].mxu0
    %639 = vdwg.mxu0
    %v640 = vadd.f32 %v592, %v635
    %v641 = vadd.f32 %v640, %v114
    %v642 = vxor.u32 %v641, 2147483648
    %v643 = vmul.f32 %v642, 1.442695
    %v644 = vpow.pop %v643
    %v645 = vadd.f32 %v644, 1.0
    %v646 = vrcp.pop %v645
    %v647 = vmul.f32 1.0, %v646
    %v648 = vtanh.pop %v641
    %v649 = vmul.f32 %v647, %v584
    %651 = vrot.lane.b32.xlu0 %v648, 64
    %v652 = vpop.permute.xlu0 %651
    %v654 = vmul.f32 %v647, %v652
    %656 = vrot.lane.b32.xlu0 %v654, 32
    %v657 = vpop.permute.xlu0 %656
    %v659 = vadd.f32 %v649, %v657
    %v660 = vtanh.pop %v659
    %662 = vrot.lane.b32.xlu0 %v660, 64
    %v663 = vpop.permute.xlu0 %662
    %v665 = vmul.f32 %v647, %v663
    %v666 = vlaneseq
    %v667 = vand.u32 %v666, 127
    %v668 = vld [vmem:[%s5] sm:$0xf]
    %v669 = vld [vmem:[%s5 + $0x4] sm:$0xf]
    %v670 = vld [vmem:[%s5 + $0x8] sm:$0xf]
    %v671 = vld [vmem:[%s5 + $0xc] sm:$0xf]
    %v672 = vld [vmem:[%s5 + $0x10] sm:$0xf]
    %v673 = vld [vmem:[%s5 + $0x14] sm:$0xf]
    %v674 = vld [vmem:[%s5 + $0x18] sm:$0xf]
    %v675 = vld [vmem:[%s5 + $0x1c] sm:$0xf]
    %v676 = vld [vmem:[%s6] sm:$0x1]
    %v677 = vld [vmem:[%s7] sm:$0xf]
    %v678 = vld [vmem:[%s7 + $0x4] sm:$0xf]
    %v679 = vld [vmem:[%s7 + $0x8] sm:$0xf]
    %v680 = vld [vmem:[%s7 + $0xc] sm:$0xf]
    %v681 = vld [vmem:[%s8] sm:$0x1]
    %682 = vst [vmem:[#allocation5] sm:$0x3] 0.0
    %v683 = vld [vmem:[%s4] sm:$0x3]
    %685 = vrot.lane.b32.xlu0 %v665, 64
    %v686 = vpop.permute.xlu0 %685
    %v688 = vsel %vm65, %v683, %v686
    %v689 = vpack.c.bf16 %v688, %v688
    %v691 = vlaneseq
    %v692 = vshrl.u32 %v691, 7
    %v693 = vsub.s32 0, %v692
    %v694 = vrot.slane %v676, %v693
    %v704 = vunpack.c.l.b16 %v668
    %v705 = vunpack.c.l.b16 %v669
    %v706 = vunpack.c.l.b16 %v670
    %v707 = vunpack.c.l.b16 %v671
    %v708 = vunpack.c.l.b16 %v672
    %v709 = vunpack.c.l.b16 %v673
    %v710 = vunpack.c.l.b16 %v674
    %v711 = vunpack.c.l.b16 %v675
    %v712 = vpack.c.b16 %v705, %v704
    %v713 = vpack.c.b16 %v707, %v706
    %v714 = vpack.c.b16 %v709, %v708
    %v715 = vpack.c.b16 %v711, %v710
    %vm720 = vcmask 523264
    %v722 = vsel %vm720, %v689, 0
    %724 = vmatprep.subr.bf16.mxu0 0
    %725 = vmatpush1.bf16.msra.mxu0 %v712
    %726 = vmatprep.subr.bf16.mxu0 0
    %727 = vmatpush1.bf16.msra.mxu0 %v713
    %728 = vmatprep.subr.bf16.mxu0 0
    %729 = vmatpush1.bf16.msra.mxu0 %v714
    %730 = vmatprep.subr.bf16.mxu0 0
    %731 = vmatpush1.bf16.msra.mxu0 %v715
    %732 = vmatprep.subr.bf16.mxu0 0
    %733 = vmatpush1.bf16.msra.mxu0 0
    %734 = vmatprep.subr.bf16.mxu0 0
    %735 = vmatpush1.bf16.msra.mxu0 0
    %736 = vmatprep.subr.bf16.mxu0 0
    %737 = vmatpush1.bf16.msra.mxu0 0
    %738 = vmatprep.subr.bf16.mxu0 0
    %739 = vmatpush1.bf16.msra.mxu0 0
    %740 = vmatprep.subr.bf16.mxu0 0
    %741 = vmatpush1.bf16.msra.mxu0 0
    %742 = vmatprep.subr.bf16.mxu0 0
    %743 = vmatpush1.bf16.msra.mxu0 0
    %744 = vmatprep.subr.bf16.mxu0 0
    %745 = vmatpush1.bf16.msra.mxu0 0
    %746 = vmatprep.subr.bf16.mxu0 0
    %747 = vmatpush1.bf16.msra.mxu0 0
    %748 = vmatprep.subr.bf16.mxu0 0
    %749 = vmatpush1.bf16.msra.mxu0 0
    %750 = vmatprep.subr.bf16.mxu0 0
    %751 = vmatpush1.bf16.msra.mxu0 0
    %752 = vmatprep.subr.bf16.mxu0 0
    %753 = vmatpush1.bf16.msra.mxu0 0
    %754 = vmatprep.subr.bf16.mxu0 0
    %755 = vmatpush1.bf16.msra.mxu0 0
    %756 = vmatprep.mubr.bf16.mxu0 0
    %757 = vmatmul.mubr.bf16.gmra.mrb[0].mxu0 %v722
    %v758 = vpop.f32.mrb[0].mxu0
    %v759 = vadd.f32 %v694, %v758
    %v760 = vpop.f32.mrb[0].mxu0
    %v761 = vpop.f32.mrb[0].mxu0
    %v762 = vpop.f32.mrb[0].mxu0
    %763 = vdwg.mxu0
    %v764 = vxor.u32 %v759, 2147483648
    %v765 = vmul.f32 %v764, 1.442695
    %v766 = vpow.pop %v765
    %v767 = vadd.f32 %v766, 1.0
    %v768 = vrcp.pop %v767
    %v769 = vmul.f32 1.0, %v768
    %v770 = vtanh.pop %v759
    %v771 = vmul.f32 %v769, %v659
    %773 = vrot.lane.b32.xlu0 %v770, 64
    %v774 = vpop.permute.xlu0 %773
    %v776 = vmul.f32 %v769, %v774
    %778 = vrot.lane.b32.xlu0 %v776, 32
    %v779 = vpop.permute.xlu0 %778
    %v781 = vadd.f32 %v771, %v779
    %v782 = vtanh.pop %v781
    %784 = vrot.lane.b32.xlu0 %v782, 64
    %v785 = vpop.permute.xlu0 %784
    %v787 = vmul.f32 %v769, %v785
    %v788 = vpack.c.bf16 %v787, %v787
    %v790 = vlaneseq
    %v791 = vshrl.u32 %v790, 7
    %v792 = vsub.s32 0, %v791
    %v793 = vrot.slane %v681, %v792
    %796 = vrot.lane.b32.xlu0 %v788, 32
    %v797 = vpop.permute.xlu0 %796
    %v802 = vunpack.c.l.b16 %v677
    %v803 = vunpack.c.l.b16 %v678
    %v804 = vunpack.c.l.b16 %v679
    %v805 = vunpack.c.l.b16 %v680
    %v806 = vpack.c.b16 %v803, %v802
    %v807 = vpack.c.b16 %v805, %v804
    %v811 = vsel %vm65, %v797, 0
    %813 = vmatprep.subr.bf16.mxu0 0
    %814 = vmatpush1.bf16.msra.mxu0 %v806
    %815 = vmatprep.subr.bf16.mxu0 0
    %816 = vmatpush1.bf16.msra.mxu0 %v807
    %817 = vmatprep.subr.bf16.mxu0 0
    %818 = vmatpush1.bf16.msra.mxu0 0
    %819 = vmatprep.subr.bf16.mxu0 0
    %820 = vmatpush1.bf16.msra.mxu0 0
    %821 = vmatprep.subr.bf16.mxu0 0
    %822 = vmatpush1.bf16.msra.mxu0 0
    %823 = vmatprep.subr.bf16.mxu0 0
    %824 = vmatpush1.bf16.msra.mxu0 0
    %825 = vmatprep.subr.bf16.mxu0 0
    %826 = vmatpush1.bf16.msra.mxu0 0
    %827 = vmatprep.subr.bf16.mxu0 0
    %828 = vmatpush1.bf16.msra.mxu0 0
    %829 = vmatprep.subr.bf16.mxu0 0
    %830 = vmatpush1.bf16.msra.mxu0 0
    %831 = vmatprep.subr.bf16.mxu0 0
    %832 = vmatpush1.bf16.msra.mxu0 0
    %833 = vmatprep.subr.bf16.mxu0 0
    %834 = vmatpush1.bf16.msra.mxu0 0
    %835 = vmatprep.subr.bf16.mxu0 0
    %836 = vmatpush1.bf16.msra.mxu0 0
    %837 = vmatprep.subr.bf16.mxu0 0
    %838 = vmatpush1.bf16.msra.mxu0 0
    %839 = vmatprep.subr.bf16.mxu0 0
    %840 = vmatpush1.bf16.msra.mxu0 0
    %841 = vmatprep.subr.bf16.mxu0 0
    %842 = vmatpush1.bf16.msra.mxu0 0
    %843 = vmatprep.subr.bf16.mxu0 0
    %844 = vmatpush1.bf16.msra.mxu0 0
    %845 = vmatprep.mubr.bf16.mxu0 0
    %846 = vmatmul.mubr.bf16.gmra.mrb[0].mxu0 %v811
    %v847 = vpop.f32.mrb[0].mxu0
    %v848 = vadd.f32 %v793, %v847
    %v849 = vpop.f32.mrb[0].mxu0
    %v850 = vpop.f32.mrb[0].mxu0
    %v851 = vpop.f32.mrb[0].mxu0
    %852 = vdwg.mxu0
    %s853 = scalar_lea.vmem [#allocation5], 2
    %854 = vst [vmem:[%s853] sm:$0x3] %v848
    %vm855 = vcmask 1041408
    %v856 = vsel %vm855, %v848, -inf
    %857 = vmax.xlane.f32.xlu0 %v856
    %v858 = vpop.xlane.xlu0 %857
    %vm859 = vcmp.eq.f32.partialorder %v848, %v858
    %v860 = vsel %vm859, %v667, 128
    %v861 = vsel %vm855, %v860, 2147483647
    %v862 = vand.u32 %v861, 65535
    %v863 = vshra.s32 %v861, 16
    %v864 = vcvt.s32.f32 %v862
    %v865 = vcvt.s32.f32 %v863
    %866 = vmin.xlane.f32.xlu0 %v865
    %v867 = vpop.xlane.xlu0 %866
    %vm868 = vcmp.eq.f32.partialorder %v865, %v867
    %v869 = vsel %vm868, %v864, inf
    %870 = vmin.xlane.f32.xlu0 %v869
    %v871 = vpop.xlane.xlu0 %870
    %v872 = vcvt.f32.s32 %v871
    %v873 = vcvt.f32.s32 %v867
    %v874 = vshll.u32 %v873, 16
    %v875 = vadd.s32 %v874, %v872
    %vm876 = vcmp.eq.s32.totalorder %v667, %v875
    %v877 = vsel %vm876, 1, 0
    %v878 = vcvt.s32.f32 %v877
    %s879 = sld [smem:[#allocation2 + $0x1]]
    %p880 = scmp.gt.s32.totalorder %s879, 0
    %s881 = scalar_lea.vmem %s4, 2
    %v882 = vld [vmem:[%s881] sm:$0x3]
    %s883 = scalar_select %p880, 1, 0
    %v884 = vstv %s883
    %vm885 = vcmp.eq.s32.totalorder %v884, 1
    %v886 = vsel %vm885, %v882, %v878
    %888 = vrot.lane.b32.xlu0 %v787, 64
    %v889 = vpop.permute.xlu0 %888
    %v891 = vsel %vm65, %v886, %v889
    %v892 = vpack.c.bf16 %v891, %v891
    %v894 = vsel %vm720, %v892, 0
    %896 = vmatprep.subr.bf16.mxu0 0
    %897 = vmatpush1.bf16.msra.mxu0 %v712
    %898 = vmatprep.subr.bf16.mxu0 0
    %899 = vmatpush1.bf16.msra.mxu0 %v713
    %900 = vmatprep.subr.bf16.mxu0 0
    %901 = vmatpush1.bf16.msra.mxu0 %v714
    %902 = vmatprep.subr.bf16.mxu0 0
    %903 = vmatpush1.bf16.msra.mxu0 %v715
    %904 = vmatprep.subr.bf16.mxu0 0
    %905 = vmatpush1.bf16.msra.mxu0 0
    %906 = vmatprep.subr.bf16.mxu0 0
    %907 = vmatpush1.bf16.msra.mxu0 0
    %908 = vmatprep.subr.bf16.mxu0 0
    %909 = vmatpush1.bf16.msra.mxu0 0
    %910 = vmatprep.subr.bf16.mxu0 0
    %911 = vmatpush1.bf16.msra.mxu0 0
    %912 = vmatprep.subr.bf16.mxu0 0
    %913 = vmatpush1.bf16.msra.mxu0 0
    %914 = vmatprep.subr.bf16.mxu0 0
    %915 = vmatpush1.bf16.msra.mxu0 0
    %916 = vmatprep.subr.bf16.mxu0 0
    %917 = vmatpush1.bf16.msra.mxu0 0
    %918 = vmatprep.subr.bf16.mxu0 0
    %919 = vmatpush1.bf16.msra.mxu0 0
    %920 = vmatprep.subr.bf16.mxu0 0
    %921 = vmatpush1.bf16.msra.mxu0 0
    %922 = vmatprep.subr.bf16.mxu0 0
    %923 = vmatpush1.bf16.msra.mxu0 0
    %924 = vmatprep.subr.bf16.mxu0 0
    %925 = vmatpush1.bf16.msra.mxu0 0
    %926 = vmatprep.subr.bf16.mxu0 0
    %927 = vmatpush1.bf16.msra.mxu0 0
    %928 = vmatprep.mubr.bf16.mxu0 0
    %929 = vmatmul.mubr.bf16.gmra.mrb[0].mxu0 %v894
    %v930 = vpop.f32.mrb[0].mxu0
    %v931 = vadd.f32 %v694, %v930
    %v932 = vpop.f32.mrb[0].mxu0
    %v933 = vpop.f32.mrb[0].mxu0
    %v934 = vpop.f32.mrb[0].mxu0
    %935 = vdwg.mxu0
    %v936 = vxor.u32 %v931, 2147483648
    %v937 = vmul.f32 %v936, 1.442695
    %v938 = vpow.pop %v937
    %v939 = vadd.f32 %v938, 1.0
    %v940 = vrcp.pop %v939
    %v941 = vmul.f32 1.0, %v940
    %v942 = vtanh.pop %v931
    %v943 = vmul.f32 %v941, %v781
    %945 = vrot.lane.b32.xlu0 %v942, 64
    %v946 = vpop.permute.xlu0 %945
    %v948 = vmul.f32 %v941, %v946
    %950 = vrot.lane.b32.xlu0 %v948, 32
    %v951 = vpop.permute.xlu0 %950
    %v953 = vadd.f32 %v943, %v951
    %v954 = vtanh.pop %v953
    %956 = vrot.lane.b32.xlu0 %v954, 64
    %v957 = vpop.permute.xlu0 %956
    %v959 = vmul.f32 %v941, %v957
    %v960 = vpack.c.bf16 %v959, %v959
    %962 = vrot.lane.b32.xlu0 %v960, 32
    %v963 = vpop.permute.xlu0 %962
    %v965 = vsel %vm65, %v963, 0
    %967 = vmatprep.subr.bf16.mxu0 0
    %968 = vmatpush1.bf16.msra.mxu0 %v806
    %969 = vmatprep.subr.bf16.mxu0 0
    %970 = vmatpush1.bf16.msra.mxu0 %v807
    %971 = vmatprep.subr.bf16.mxu0 0
    %972 = vmatpush1.bf16.msra.mxu0 0
    %973 = vmatprep.subr.bf16.mxu0 0
    %974 = vmatpush1.bf16.msra.mxu0 0
    %975 = vmatprep.subr.bf16.mxu0 0
    %976 = vmatpush1.bf16.msra.mxu0 0
    %977 = vmatprep.subr.bf16.mxu0 0
    %978 = vmatpush1.bf16.msra.mxu0 0
    %979 = vmatprep.subr.bf16.mxu0 0
    %980 = vmatpush1.bf16.msra.mxu0 0
    %981 = vmatprep.subr.bf16.mxu0 0
    %982 = vmatpush1.bf16.msra.mxu0 0
    %983 = vmatprep.subr.bf16.mxu0 0
    %984 = vmatpush1.bf16.msra.mxu0 0
    %985 = vmatprep.subr.bf16.mxu0 0
    %986 = vmatpush1.bf16.msra.mxu0 0
    %987 = vmatprep.subr.bf16.mxu0 0
    %988 = vmatpush1.bf16.msra.mxu0 0
    %989 = vmatprep.subr.bf16.mxu0 0
    %990 = vmatpush1.bf16.msra.mxu0 0
    %991 = vmatprep.subr.bf16.mxu0 0
    %992 = vmatpush1.bf16.msra.mxu0 0
    %993 = vmatprep.subr.bf16.mxu0 0
    %994 = vmatpush1.bf16.msra.mxu0 0
    %995 = vmatprep.subr.bf16.mxu0 0
    %996 = vmatpush1.bf16.msra.mxu0 0
    %997 = vmatprep.subr.bf16.mxu0 0
    %998 = vmatpush1.bf16.msra.mxu0 0
    %999 = vmatprep.mubr.bf16.mxu0 0
    %1000 = vmatmul.mubr.bf16.gmra.mrb[0].mxu0 %v965
    %v1001 = vpop.f32.mrb[0].mxu0
    %v1002 = vadd.f32 %v793, %v1001
    %v1003 = vpop.f32.mrb[0].mxu0
    %v1004 = vpop.f32.mrb[0].mxu0
    %v1005 = vpop.f32.mrb[0].mxu0
    %1006 = vdwg.mxu0
    %s1007 = scalar_lea.vmem [#allocation5], 4
    %1008 = vst [vmem:[%s1007] sm:$0x3] %v1002
    %v1009 = vsel %vm855, %v1002, -inf
    %1010 = vmax.xlane.f32.xlu0 %v1009
    %v1011 = vpop.xlane.xlu0 %1010
    %vm1012 = vcmp.eq.f32.partialorder %v1002, %v1011
    %v1013 = vsel %vm1012, %v667, 128
    %v1014 = vsel %vm855, %v1013, 2147483647
    %v1015 = vand.u32 %v1014, 65535
    %v1016 = vshra.s32 %v1014, 16
    %v1017 = vcvt.s32.f32 %v1015
    %v1018 = vcvt.s32.f32 %v1016
    %1019 = vmin.xlane.f32.xlu0 %v1018
    %v1020 = vpop.xlane.xlu0 %1019
    %vm1021 = vcmp.eq.f32.partialorder %v1018, %v1020
    %v1022 = vsel %vm1021, %v1017, inf
    %1023 = vmin.xlane.f32.xlu0 %v1022
    %v1024 = vpop.xlane.xlu0 %1023
    %v1025 = vcvt.f32.s32 %v1024
    %v1026 = vcvt.f32.s32 %v1020
    %v1027 = vshll.u32 %v1026, 16
    %v1028 = vadd.s32 %v1027, %v1025
    %vm1029 = vcmp.eq.s32.totalorder %v667, %v1028
    %v1030 = vsel %vm1029, 1, 0
    %v1031 = vcvt.s32.f32 %v1030
    %s1032 = sld [smem:[#allocation2 + $0x2]]
    %p1033 = scmp.gt.s32.totalorder %s1032, 0
    %s1034 = scalar_lea.vmem %s4, 4
    %v1035 = vld [vmem:[%s1034] sm:$0x3]
    %s1036 = scalar_select %p1033, 1, 0
    %v1037 = vstv %s1036
    %vm1038 = vcmp.eq.s32.totalorder %v1037, 1
    %v1039 = vsel %vm1038, %v1035, %v1031
    %1041 = vrot.lane.b32.xlu0 %v959, 64
    %v1042 = vpop.permute.xlu0 %1041
    %v1044 = vsel %vm65, %v1039, %v1042
    %v1045 = vpack.c.bf16 %v1044, %v1044
    %v1047 = vsel %vm720, %v1045, 0
    %1049 = vmatprep.subr.bf16.mxu0 0
    %1050 = vmatpush1.bf16.msra.mxu0 %v712
    %1051 = vmatprep.subr.bf16.mxu0 0
    %1052 = vmatpush1.bf16.msra.mxu0 %v713
    %1053 = vmatprep.subr.bf16.mxu0 0
    %1054 = vmatpush1.bf16.msra.mxu0 %v714
    %1055 = vmatprep.subr.bf16.mxu0 0
    %1056 = vmatpush1.bf16.msra.mxu0 %v715
    %1057 = vmatprep.subr.bf16.mxu0 0
    %1058 = vmatpush1.bf16.msra.mxu0 0
    %1059 = vmatprep.subr.bf16.mxu0 0
    %1060 = vmatpush1.bf16.msra.mxu0 0
    %1061 = vmatprep.subr.bf16.mxu0 0
    %1062 = vmatpush1.bf16.msra.mxu0 0
    %1063 = vmatprep.subr.bf16.mxu0 0
    %1064 = vmatpush1.bf16.msra.mxu0 0
    %1065 = vmatprep.subr.bf16.mxu0 0
    %1066 = vmatpush1.bf16.msra.mxu0 0
    %1067 = vmatprep.subr.bf16.mxu0 0
    %1068 = vmatpush1.bf16.msra.mxu0 0
    %1069 = vmatprep.subr.bf16.mxu0 0
    %1070 = vmatpush1.bf16.msra.mxu0 0
    %1071 = vmatprep.subr.bf16.mxu0 0
    %1072 = vmatpush1.bf16.msra.mxu0 0
    %1073 = vmatprep.subr.bf16.mxu0 0
    %1074 = vmatpush1.bf16.msra.mxu0 0
    %1075 = vmatprep.subr.bf16.mxu0 0
    %1076 = vmatpush1.bf16.msra.mxu0 0
    %1077 = vmatprep.subr.bf16.mxu0 0
    %1078 = vmatpush1.bf16.msra.mxu0 0
    %1079 = vmatprep.subr.bf16.mxu0 0
    %1080 = vmatpush1.bf16.msra.mxu0 0
    %1081 = vmatprep.mubr.bf16.mxu0 0
    %1082 = vmatmul.mubr.bf16.gmra.mrb[0].mxu0 %v1047
    %v1083 = vpop.f32.mrb[0].mxu0
    %v1084 = vadd.f32 %v694, %v1083
    %v1085 = vpop.f32.mrb[0].mxu0
    %v1086 = vpop.f32.mrb[0].mxu0
    %v1087 = vpop.f32.mrb[0].mxu0
    %1088 = vdwg.mxu0
    %v1089 = vxor.u32 %v1084, 2147483648
    %v1090 = vmul.f32 %v1089, 1.442695
    %v1091 = vpow.pop %v1090
    %v1092 = vadd.f32 %v1091, 1.0
    %v1093 = vrcp.pop %v1092
    %v1094 = vmul.f32 1.0, %v1093
    %v1095 = vtanh.pop %v1084
    %v1096 = vmul.f32 %v1094, %v953
    %1098 = vrot.lane.b32.xlu0 %v1095, 64
    %v1099 = vpop.permute.xlu0 %1098
    %v1101 = vmul.f32 %v1094, %v1099
    %1103 = vrot.lane.b32.xlu0 %v1101, 32
    %v1104 = vpop.permute.xlu0 %1103
    %v1106 = vadd.f32 %v1096, %v1104
    %v1107 = vtanh.pop %v1106
    %1109 = vrot.lane.b32.xlu0 %v1107, 64
    %v1110 = vpop.permute.xlu0 %1109
    %v1112 = vmul.f32 %v1094, %v1110
    %v1113 = vpack.c.bf16 %v1112, %v1112
    %1115 = vrot.lane.b32.xlu0 %v1113, 32
    %v1116 = vpop.permute.xlu0 %1115
    %v1118 = vsel %vm65, %v1116, 0
    %1120 = vmatprep.subr.bf16.mxu0 0
    %1121 = vmatpush1.bf16.msra.mxu0 %v806
    %1122 = vmatprep.subr.bf16.mxu0 0
    %1123 = vmatpush1.bf16.msra.mxu0 %v807
    %1124 = vmatprep.subr.bf16.mxu0 0
    %1125 = vmatpush1.bf16.msra.mxu0 0
    %1126 = vmatprep.subr.bf16.mxu0 0
    %1127 = vmatpush1.bf16.msra.mxu0 0
    %1128 = vmatprep.subr.bf16.mxu0 0
    %1129 = vmatpush1.bf16.msra.mxu0 0
    %1130 = vmatprep.subr.bf16.mxu0 0
    %1131 = vmatpush1.bf16.msra.mxu0 0
    %1132 = vmatprep.subr.bf16.mxu0 0
    %1133 = vmatpush1.bf16.msra.mxu0 0
    %1134 = vmatprep.subr.bf16.mxu0 0
    %1135 = vmatpush1.bf16.msra.mxu0 0
    %1136 = vmatprep.subr.bf16.mxu0 0
    %1137 = vmatpush1.bf16.msra.mxu0 0
    %1138 = vmatprep.subr.bf16.mxu0 0
    %1139 = vmatpush1.bf16.msra.mxu0 0
    %1140 = vmatprep.subr.bf16.mxu0 0
    %1141 = vmatpush1.bf16.msra.mxu0 0
    %1142 = vmatprep.subr.bf16.mxu0 0
    %1143 = vmatpush1.bf16.msra.mxu0 0
    %1144 = vmatprep.subr.bf16.mxu0 0
    %1145 = vmatpush1.bf16.msra.mxu0 0
    %1146 = vmatprep.subr.bf16.mxu0 0
    %1147 = vmatpush1.bf16.msra.mxu0 0
    %1148 = vmatprep.subr.bf16.mxu0 0
    %1149 = vmatpush1.bf16.msra.mxu0 0
    %1150 = vmatprep.subr.bf16.mxu0 0
    %1151 = vmatpush1.bf16.msra.mxu0 0
    %1152 = vmatprep.mubr.bf16.mxu0 0
    %1153 = vmatmul.mubr.bf16.gmra.mrb[0].mxu0 %v1118
    %v1154 = vpop.f32.mrb[0].mxu0
    %v1155 = vadd.f32 %v793, %v1154
    %v1156 = vpop.f32.mrb[0].mxu0
    %v1157 = vpop.f32.mrb[0].mxu0
    %v1158 = vpop.f32.mrb[0].mxu0
    %1159 = vdwg.mxu0
    %s1160 = scalar_lea.vmem [#allocation5], 6
    %1161 = vst [vmem:[%s1160] sm:$0x3] %v1155
    %v1162 = vsel %vm855, %v1155, -inf
    %1163 = vmax.xlane.f32.xlu0 %v1162
    %v1164 = vpop.xlane.xlu0 %1163
    %vm1165 = vcmp.eq.f32.partialorder %v1155, %v1164
    %v1166 = vsel %vm1165, %v667, 128
    %v1167 = vsel %vm855, %v1166, 2147483647
    %v1168 = vand.u32 %v1167, 65535
    %v1169 = vshra.s32 %v1167, 16
    %v1170 = vcvt.s32.f32 %v1168
    %v1171 = vcvt.s32.f32 %v1169
    %1172 = vmin.xlane.f32.xlu0 %v1171
    %v1173 = vpop.xlane.xlu0 %1172
    %vm1174 = vcmp.eq.f32.partialorder %v1171, %v1173
    %v1175 = vsel %vm1174, %v1170, inf
    %1176 = vmin.xlane.f32.xlu0 %v1175
    %v1177 = vpop.xlane.xlu0 %1176
    %v1178 = vcvt.f32.s32 %v1177
    %v1179 = vcvt.f32.s32 %v1173
    %v1180 = vshll.u32 %v1179, 16
    %v1181 = vadd.s32 %v1180, %v1178
    %vm1182 = vcmp.eq.s32.totalorder %v667, %v1181
    %v1183 = vsel %vm1182, 1, 0
    %v1184 = vcvt.s32.f32 %v1183
    %s1185 = sld [smem:[#allocation2 + $0x3]]
    %p1186 = scmp.gt.s32.totalorder %s1185, 0
    %s1187 = scalar_lea.vmem %s4, 6
    %v1188 = vld [vmem:[%s1187] sm:$0x3]
    %s1189 = scalar_select %p1186, 1, 0
    %v1190 = vstv %s1189
    %vm1191 = vcmp.eq.s32.totalorder %v1190, 1
    %v1192 = vsel %vm1191, %v1188, %v1184
    %1194 = vrot.lane.b32.xlu0 %v1112, 64
    %v1195 = vpop.permute.xlu0 %1194
    %v1197 = vsel %vm65, %v1192, %v1195
    %v1198 = vpack.c.bf16 %v1197, %v1197
    %v1200 = vsel %vm720, %v1198, 0
    %1202 = vmatprep.subr.bf16.mxu0 0
    %1203 = vmatpush1.bf16.msra.mxu0 %v712
    %1204 = vmatprep.subr.bf16.mxu0 0
    %1205 = vmatpush1.bf16.msra.mxu0 %v713
    %1206 = vmatprep.subr.bf16.mxu0 0
    %1207 = vmatpush1.bf16.msra.mxu0 %v714
    %1208 = vmatprep.subr.bf16.mxu0 0
    %1209 = vmatpush1.bf16.msra.mxu0 %v715
    %1210 = vmatprep.subr.bf16.mxu0 0
    %1211 = vmatpush1.bf16.msra.mxu0 0
    %1212 = vmatprep.subr.bf16.mxu0 0
    %1213 = vmatpush1.bf16.msra.mxu0 0
    %1214 = vmatprep.subr.bf16.mxu0 0
    %1215 = vmatpush1.bf16.msra.mxu0 0
    %1216 = vmatprep.subr.bf16.mxu0 0
    %1217 = vmatpush1.bf16.msra.mxu0 0
    %1218 = vmatprep.subr.bf16.mxu0 0
    %1219 = vmatpush1.bf16.msra.mxu0 0
    %1220 = vmatprep.subr.bf16.mxu0 0
    %1221 = vmatpush1.bf16.msra.mxu0 0
    %1222 = vmatprep.subr.bf16.mxu0 0
    %1223 = vmatpush1.bf16.msra.mxu0 0
    %1224 = vmatprep.subr.bf16.mxu0 0
    %1225 = vmatpush1.bf16.msra.mxu0 0
    %1226 = vmatprep.subr.bf16.mxu0 0
    %1227 = vmatpush1.bf16.msra.mxu0 0
    %1228 = vmatprep.subr.bf16.mxu0 0
    %1229 = vmatpush1.bf16.msra.mxu0 0
    %1230 = vmatprep.subr.bf16.mxu0 0
    %1231 = vmatpush1.bf16.msra.mxu0 0
    %1232 = vmatprep.subr.bf16.mxu0 0
    %1233 = vmatpush1.bf16.msra.mxu0 0
    %1234 = vmatprep.mubr.bf16.mxu0 0
    %1235 = vmatmul.mubr.bf16.gmra.mrb[0].mxu0 %v1200
    %v1236 = vpop.f32.mrb[0].mxu0
    %v1237 = vadd.f32 %v694, %v1236
    %v1238 = vpop.f32.mrb[0].mxu0
    %v1239 = vpop.f32.mrb[0].mxu0
    %v1240 = vpop.f32.mrb[0].mxu0
    %1241 = vdwg.mxu0
    %v1242 = vxor.u32 %v1237, 2147483648
    %v1243 = vmul.f32 %v1242, 1.442695
    %v1244 = vpow.pop %v1243
    %v1245 = vadd.f32 %v1244, 1.0
    %v1246 = vrcp.pop %v1245
    %v1247 = vmul.f32 1.0, %v1246
    %v1248 = vtanh.pop %v1237
    %v1249 = vmul.f32 %v1247, %v1106
    %1251 = vrot.lane.b32.xlu0 %v1248, 64
    %v1252 = vpop.permute.xlu0 %1251
    %v1254 = vmul.f32 %v1247, %v1252
    %1256 = vrot.lane.b32.xlu0 %v1254, 32
    %v1257 = vpop.permute.xlu0 %1256
    %v1259 = vadd.f32 %v1249, %v1257
    %v1260 = vtanh.pop %v1259
    %1262 = vrot.lane.b32.xlu0 %v1260, 64
    %v1263 = vpop.permute.xlu0 %1262
    %v1265 = vmul.f32 %v1247, %v1263
    %v1266 = vpack.c.bf16 %v1265, %v1265
    %1268 = vrot.lane.b32.xlu0 %v1266, 32
    %v1269 = vpop.permute.xlu0 %1268
    %v1271 = vsel %vm65, %v1269, 0
    %1273 = vmatprep.subr.bf16.mxu0 0
    %1274 = vmatpush1.bf16.msra.mxu0 %v806
    %1275 = vmatprep.subr.bf16.mxu0 0
    %1276 = vmatpush1.bf16.msra.mxu0 %v807
    %1277 = vmatprep.subr.bf16.mxu0 0
    %1278 = vmatpush1.bf16.msra.mxu0 0
    %1279 = vmatprep.subr.bf16.mxu0 0
    %1280 = vmatpush1.bf16.msra.mxu0 0
    %1281 = vmatprep.subr.bf16.mxu0 0
    %1282 = vmatpush1.bf16.msra.mxu0 0
    %1283 = vmatprep.subr.bf16.mxu0 0
    %1284 = vmatpush1.bf16.msra.mxu0 0
    %1285 = vmatprep.subr.bf16.mxu0 0
    %1286 = vmatpush1.bf16.msra.mxu0 0
    %1287 = vmatprep.subr.bf16.mxu0 0
    %1288 = vmatpush1.bf16.msra.mxu0 0
    %1289 = vmatprep.subr.bf16.mxu0 0
    %1290 = vmatpush1.bf16.msra.mxu0 0
    %1291 = vmatprep.subr.bf16.mxu0 0
    %1292 = vmatpush1.bf16.msra.mxu0 0
    %1293 = vmatprep.subr.bf16.mxu0 0
    %1294 = vmatpush1.bf16.msra.mxu0 0
    %1295 = vmatprep.subr.bf16.mxu0 0
    %1296 = vmatpush1.bf16.msra.mxu0 0
    %1297 = vmatprep.subr.bf16.mxu0 0
    %1298 = vmatpush1.bf16.msra.mxu0 0
    %1299 = vmatprep.subr.bf16.mxu0 0
    %1300 = vmatpush1.bf16.msra.mxu0 0
    %1301 = vmatprep.subr.bf16.mxu0 0
    %1302 = vmatpush1.bf16.msra.mxu0 0
    %1303 = vmatprep.subr.bf16.mxu0 0
    %1304 = vmatpush1.bf16.msra.mxu0 0
    %1305 = vmatprep.mubr.bf16.mxu0 0
    %1306 = vmatmul.mubr.bf16.gmra.mrb[0].mxu0 %v1271
    %v1307 = vpop.f32.mrb[0].mxu0
    %v1308 = vadd.f32 %v793, %v1307
    %v1309 = vpop.f32.mrb[0].mxu0
    %v1310 = vpop.f32.mrb[0].mxu0
    %v1311 = vpop.f32.mrb[0].mxu0
    %1312 = vdwg.mxu0
    %s1313 = scalar_lea.vmem [#allocation5], 8
    %1314 = vst [vmem:[%s1313] sm:$0x3] %v1308
    %v1315 = vsel %vm855, %v1308, -inf
    %1316 = vmax.xlane.f32.xlu0 %v1315
    %v1317 = vpop.xlane.xlu0 %1316
    %vm1318 = vcmp.eq.f32.partialorder %v1308, %v1317
    %v1319 = vsel %vm1318, %v667, 128
    %v1320 = vsel %vm855, %v1319, 2147483647
    %v1321 = vand.u32 %v1320, 65535
    %v1322 = vshra.s32 %v1320, 16
    %v1323 = vcvt.s32.f32 %v1321
    %v1324 = vcvt.s32.f32 %v1322
    %1325 = vmin.xlane.f32.xlu0 %v1324
    %v1326 = vpop.xlane.xlu0 %1325
    %vm1327 = vcmp.eq.f32.partialorder %v1324, %v1326
    %v1328 = vsel %vm1327, %v1323, inf
    %1329 = vmin.xlane.f32.xlu0 %v1328
    %v1330 = vpop.xlane.xlu0 %1329
    %v1331 = vcvt.f32.s32 %v1330
    %v1332 = vcvt.f32.s32 %v1326
    %v1333 = vshll.u32 %v1332, 16
    %v1334 = vadd.s32 %v1333, %v1331
    %vm1335 = vcmp.eq.s32.totalorder %v667, %v1334
    %v1336 = vsel %vm1335, 1, 0
    %v1337 = vcvt.s32.f32 %v1336
    %s1338 = sld [smem:[#allocation2 + $0x4]]
    %p1339 = scmp.gt.s32.totalorder %s1338, 0
    %s1340 = scalar_lea.vmem %s4, 8
    %v1341 = vld [vmem:[%s1340] sm:$0x3]
    %s1342 = scalar_select %p1339, 1, 0
    %v1343 = vstv %s1342
    %vm1344 = vcmp.eq.s32.totalorder %v1343, 1
    %v1345 = vsel %vm1344, %v1341, %v1337
    %1347 = vrot.lane.b32.xlu0 %v1265, 64
    %v1348 = vpop.permute.xlu0 %1347
    %v1350 = vsel %vm65, %v1345, %v1348
    %v1351 = vpack.c.bf16 %v1350, %v1350
    %v1353 = vsel %vm720, %v1351, 0
    %1355 = vmatprep.subr.bf16.mxu0 0
    %1356 = vmatpush1.bf16.msra.mxu0 %v712
    %1357 = vmatprep.subr.bf16.mxu0 0
    %1358 = vmatpush1.bf16.msra.mxu0 %v713
    %1359 = vmatprep.subr.bf16.mxu0 0
    %1360 = vmatpush1.bf16.msra.mxu0 %v714
    %1361 = vmatprep.subr.bf16.mxu0 0
    %1362 = vmatpush1.bf16.msra.mxu0 %v715
    %1363 = vmatprep.subr.bf16.mxu0 0
    %1364 = vmatpush1.bf16.msra.mxu0 0
    %1365 = vmatprep.subr.bf16.mxu0 0
    %1366 = vmatpush1.bf16.msra.mxu0 0
    %1367 = vmatprep.subr.bf16.mxu0 0
    %1368 = vmatpush1.bf16.msra.mxu0 0
    %1369 = vmatprep.subr.bf16.mxu0 0
    %1370 = vmatpush1.bf16.msra.mxu0 0
    %1371 = vmatprep.subr.bf16.mxu0 0
    %1372 = vmatpush1.bf16.msra.mxu0 0
    %1373 = vmatprep.subr.bf16.mxu0 0
    %1374 = vmatpush1.bf16.msra.mxu0 0
    %1375 = vmatprep.subr.bf16.mxu0 0
    %1376 = vmatpush1.bf16.msra.mxu0 0
    %1377 = vmatprep.subr.bf16.mxu0 0
    %1378 = vmatpush1.bf16.msra.mxu0 0
    %1379 = vmatprep.subr.bf16.mxu0 0
    %1380 = vmatpush1.bf16.msra.mxu0 0
    %1381 = vmatprep.subr.bf16.mxu0 0
    %1382 = vmatpush1.bf16.msra.mxu0 0
    %1383 = vmatprep.subr.bf16.mxu0 0
    %1384 = vmatpush1.bf16.msra.mxu0 0
    %1385 = vmatprep.subr.bf16.mxu0 0
    %1386 = vmatpush1.bf16.msra.mxu0 0
    %1387 = vmatprep.mubr.bf16.mxu0 0
    %1388 = vmatmul.mubr.bf16.gmra.mrb[0].mxu0 %v1353
    %v1389 = vpop.f32.mrb[0].mxu0
    %v1390 = vadd.f32 %v694, %v1389
    %v1391 = vpop.f32.mrb[0].mxu0
    %v1392 = vpop.f32.mrb[0].mxu0
    %v1393 = vpop.f32.mrb[0].mxu0
    %1394 = vdwg.mxu0
    %v1395 = vxor.u32 %v1390, 2147483648
    %v1396 = vmul.f32 %v1395, 1.442695
    %v1397 = vpow.pop %v1396
    %v1398 = vadd.f32 %v1397, 1.0
    %v1399 = vrcp.pop %v1398
    %v1400 = vmul.f32 1.0, %v1399
    %v1401 = vtanh.pop %v1390
    %v1402 = vmul.f32 %v1400, %v1259
    %1404 = vrot.lane.b32.xlu0 %v1401, 64
    %v1405 = vpop.permute.xlu0 %1404
    %v1407 = vmul.f32 %v1400, %v1405
    %1409 = vrot.lane.b32.xlu0 %v1407, 32
    %v1410 = vpop.permute.xlu0 %1409
    %v1412 = vadd.f32 %v1402, %v1410
    %v1413 = vtanh.pop %v1412
    %1415 = vrot.lane.b32.xlu0 %v1413, 64
    %v1416 = vpop.permute.xlu0 %1415
    %v1418 = vmul.f32 %v1400, %v1416
    %v1419 = vpack.c.bf16 %v1418, %v1418
    %1421 = vrot.lane.b32.xlu0 %v1419, 32
    %v1422 = vpop.permute.xlu0 %1421
    %v1424 = vsel %vm65, %v1422, 0
    %1426 = vmatprep.subr.bf16.mxu0 0
    %1427 = vmatpush1.bf16.msra.mxu0 %v806
    %1428 = vmatprep.subr.bf16.mxu0 0
    %1429 = vmatpush1.bf16.msra.mxu0 %v807
    %1430 = vmatprep.subr.bf16.mxu0 0
    %1431 = vmatpush1.bf16.msra.mxu0 0
    %1432 = vmatprep.subr.bf16.mxu0 0
    %1433 = vmatpush1.bf16.msra.mxu0 0
    %1434 = vmatprep.subr.bf16.mxu0 0
    %1435 = vmatpush1.bf16.msra.mxu0 0
    %1436 = vmatprep.subr.bf16.mxu0 0
    %1437 = vmatpush1.bf16.msra.mxu0 0
    %1438 = vmatprep.subr.bf16.mxu0 0
    %1439 = vmatpush1.bf16.msra.mxu0 0
    %1440 = vmatprep.subr.bf16.mxu0 0
    %1441 = vmatpush1.bf16.msra.mxu0 0
    %1442 = vmatprep.subr.bf16.mxu0 0
    %1443 = vmatpush1.bf16.msra.mxu0 0
    %1444 = vmatprep.subr.bf16.mxu0 0
    %1445 = vmatpush1.bf16.msra.mxu0 0
    %1446 = vmatprep.subr.bf16.mxu0 0
    %1447 = vmatpush1.bf16.msra.mxu0 0
    %1448 = vmatprep.subr.bf16.mxu0 0
    %1449 = vmatpush1.bf16.msra.mxu0 0
    %1450 = vmatprep.subr.bf16.mxu0 0
    %1451 = vmatpush1.bf16.msra.mxu0 0
    %1452 = vmatprep.subr.bf16.mxu0 0
    %1453 = vmatpush1.bf16.msra.mxu0 0
    %1454 = vmatprep.subr.bf16.mxu0 0
    %1455 = vmatpush1.bf16.msra.mxu0 0
    %1456 = vmatprep.subr.bf16.mxu0 0
    %1457 = vmatpush1.bf16.msra.mxu0 0
    %1458 = vmatprep.mubr.bf16.mxu0 0
    %1459 = vmatmul.mubr.bf16.gmra.mrb[0].mxu0 %v1424
    %v1460 = vpop.f32.mrb[0].mxu0
    %v1461 = vadd.f32 %v793, %v1460
    %v1462 = vpop.f32.mrb[0].mxu0
    %v1463 = vpop.f32.mrb[0].mxu0
    %v1464 = vpop.f32.mrb[0].mxu0
    %1465 = vdwg.mxu0
    %s1466 = scalar_lea.vmem [#allocation5], 10
    %1467 = vst [vmem:[%s1466] sm:$0x3] %v1461
    %v1468 = vsel %vm855, %v1461, -inf
    %1469 = vmax.xlane.f32.xlu0 %v1468
    %v1470 = vpop.xlane.xlu0 %1469
    %vm1471 = vcmp.eq.f32.partialorder %v1461, %v1470
    %v1472 = vsel %vm1471, %v667, 128
    %v1473 = vsel %vm855, %v1472, 2147483647
    %v1474 = vand.u32 %v1473, 65535
    %v1475 = vshra.s32 %v1473, 16
    %v1476 = vcvt.s32.f32 %v1474
    %v1477 = vcvt.s32.f32 %v1475
    %1478 = vmin.xlane.f32.xlu0 %v1477
    %v1479 = vpop.xlane.xlu0 %1478
    %vm1480 = vcmp.eq.f32.partialorder %v1477, %v1479
    %v1481 = vsel %vm1480, %v1476, inf
    %1482 = vmin.xlane.f32.xlu0 %v1481
    %v1483 = vpop.xlane.xlu0 %1482
    %v1484 = vcvt.f32.s32 %v1483
    %v1485 = vcvt.f32.s32 %v1479
    %v1486 = vshll.u32 %v1485, 16
    %v1487 = vadd.s32 %v1486, %v1484
    %vm1488 = vcmp.eq.s32.totalorder %v667, %v1487
    %v1489 = vsel %vm1488, 1, 0
    %v1490 = vcvt.s32.f32 %v1489
    %s1491 = sld [smem:[#allocation2 + $0x5]]
    %p1492 = scmp.gt.s32.totalorder %s1491, 0
    %s1493 = scalar_lea.vmem %s4, 10
    %v1494 = vld [vmem:[%s1493] sm:$0x3]
    %s1495 = scalar_select %p1492, 1, 0
    %v1496 = vstv %s1495
    %vm1497 = vcmp.eq.s32.totalorder %v1496, 1
    %v1498 = vsel %vm1497, %v1494, %v1490
    %1500 = vrot.lane.b32.xlu0 %v1418, 64
    %v1501 = vpop.permute.xlu0 %1500
    %v1503 = vsel %vm65, %v1498, %v1501
    %v1504 = vpack.c.bf16 %v1503, %v1503
    %v1506 = vsel %vm720, %v1504, 0
    %1508 = vmatprep.subr.bf16.mxu0 0
    %1509 = vmatpush1.bf16.msra.mxu0 %v712
    %1510 = vmatprep.subr.bf16.mxu0 0
    %1511 = vmatpush1.bf16.msra.mxu0 %v713
    %1512 = vmatprep.subr.bf16.mxu0 0
    %1513 = vmatpush1.bf16.msra.mxu0 %v714
    %1514 = vmatprep.subr.bf16.mxu0 0
    %1515 = vmatpush1.bf16.msra.mxu0 %v715
    %1516 = vmatprep.subr.bf16.mxu0 0
    %1517 = vmatpush1.bf16.msra.mxu0 0
    %1518 = vmatprep.subr.bf16.mxu0 0
    %1519 = vmatpush1.bf16.msra.mxu0 0
    %1520 = vmatprep.subr.bf16.mxu0 0
    %1521 = vmatpush1.bf16.msra.mxu0 0
    %1522 = vmatprep.subr.bf16.mxu0 0
    %1523 = vmatpush1.bf16.msra.mxu0 0
    %1524 = vmatprep.subr.bf16.mxu0 0
    %1525 = vmatpush1.bf16.msra.mxu0 0
    %1526 = vmatprep.subr.bf16.mxu0 0
    %1527 = vmatpush1.bf16.msra.mxu0 0
    %1528 = vmatprep.subr.bf16.mxu0 0
    %1529 = vmatpush1.bf16.msra.mxu0 0
    %1530 = vmatprep.subr.bf16.mxu0 0
    %1531 = vmatpush1.bf16.msra.mxu0 0
    %1532 = vmatprep.subr.bf16.mxu0 0
    %1533 = vmatpush1.bf16.msra.mxu0 0
    %1534 = vmatprep.subr.bf16.mxu0 0
    %1535 = vmatpush1.bf16.msra.mxu0 0
    %1536 = vmatprep.subr.bf16.mxu0 0
    %1537 = vmatpush1.bf16.msra.mxu0 0
    %1538 = vmatprep.subr.bf16.mxu0 0
    %1539 = vmatpush1.bf16.msra.mxu0 0
    %1540 = vmatprep.mubr.bf16.mxu0 0
    %1541 = vmatmul.mubr.bf16.gmra.mrb[0].mxu0 %v1506
    %v1542 = vpop.f32.mrb[0].mxu0
    %v1543 = vadd.f32 %v694, %v1542
    %v1544 = vpop.f32.mrb[0].mxu0
    %v1545 = vpop.f32.mrb[0].mxu0
    %v1546 = vpop.f32.mrb[0].mxu0
    %1547 = vdwg.mxu0
    %v1548 = vxor.u32 %v1543, 2147483648
    %v1549 = vmul.f32 %v1548, 1.442695
    %v1550 = vpow.pop %v1549
    %v1551 = vadd.f32 %v1550, 1.0
    %v1552 = vrcp.pop %v1551
    %v1553 = vmul.f32 1.0, %v1552
    %v1554 = vtanh.pop %v1543
    %v1555 = vmul.f32 %v1553, %v1412
    %1557 = vrot.lane.b32.xlu0 %v1554, 64
    %v1558 = vpop.permute.xlu0 %1557
    %v1560 = vmul.f32 %v1553, %v1558
    %1562 = vrot.lane.b32.xlu0 %v1560, 32
    %v1563 = vpop.permute.xlu0 %1562
    %v1565 = vadd.f32 %v1555, %v1563
    %v1566 = vtanh.pop %v1565
    %1568 = vrot.lane.b32.xlu0 %v1566, 64
    %v1569 = vpop.permute.xlu0 %1568
    %v1571 = vmul.f32 %v1553, %v1569
    %v1572 = vpack.c.bf16 %v1571, %v1571
    %1574 = vrot.lane.b32.xlu0 %v1572, 32
    %v1575 = vpop.permute.xlu0 %1574
    %v1577 = vsel %vm65, %v1575, 0
    %1579 = vmatprep.subr.bf16.mxu0 0
    %1580 = vmatpush1.bf16.msra.mxu0 %v806
    %1581 = vmatprep.subr.bf16.mxu0 0
    %1582 = vmatpush1.bf16.msra.mxu0 %v807
    %1583 = vmatprep.subr.bf16.mxu0 0
    %1584 = vmatpush1.bf16.msra.mxu0 0
    %1585 = vmatprep.subr.bf16.mxu0 0
    %1586 = vmatpush1.bf16.msra.mxu0 0
    %1587 = vmatprep.subr.bf16.mxu0 0
    %1588 = vmatpush1.bf16.msra.mxu0 0
    %1589 = vmatprep.subr.bf16.mxu0 0
    %1590 = vmatpush1.bf16.msra.mxu0 0
    %1591 = vmatprep.subr.bf16.mxu0 0
    %1592 = vmatpush1.bf16.msra.mxu0 0
    %1593 = vmatprep.subr.bf16.mxu0 0
    %1594 = vmatpush1.bf16.msra.mxu0 0
    %1595 = vmatprep.subr.bf16.mxu0 0
    %1596 = vmatpush1.bf16.msra.mxu0 0
    %1597 = vmatprep.subr.bf16.mxu0 0
    %1598 = vmatpush1.bf16.msra.mxu0 0
    %1599 = vmatprep.subr.bf16.mxu0 0
    %1600 = vmatpush1.bf16.msra.mxu0 0
    %1601 = vmatprep.subr.bf16.mxu0 0
    %1602 = vmatpush1.bf16.msra.mxu0 0
    %1603 = vmatprep.subr.bf16.mxu0 0
    %1604 = vmatpush1.bf16.msra.mxu0 0
    %1605 = vmatprep.subr.bf16.mxu0 0
    %1606 = vmatpush1.bf16.msra.mxu0 0
    %1607 = vmatprep.subr.bf16.mxu0 0
    %1608 = vmatpush1.bf16.msra.mxu0 0
    %1609 = vmatprep.subr.bf16.mxu0 0
    %1610 = vmatpush1.bf16.msra.mxu0 0
    %1611 = vmatprep.mubr.bf16.mxu0 0
    %1612 = vmatmul.mubr.bf16.gmra.mrb[0].mxu0 %v1577
    %v1613 = vpop.f32.mrb[0].mxu0
    %v1614 = vadd.f32 %v793, %v1613
    %v1615 = vpop.f32.mrb[0].mxu0
    %v1616 = vpop.f32.mrb[0].mxu0
    %v1617 = vpop.f32.mrb[0].mxu0
    %1618 = vdwg.mxu0
    %s1619 = scalar_lea.vmem [#allocation5], 12
    %1620 = vst [vmem:[%s1619] sm:$0x3] %v1614
    %v1621 = vsel %vm855, %v1614, -inf
    %1622 = vmax.xlane.f32.xlu0 %v1621
    %v1623 = vpop.xlane.xlu0 %1622
    %vm1624 = vcmp.eq.f32.partialorder %v1614, %v1623
    %v1625 = vsel %vm1624, %v667, 128
    %v1626 = vsel %vm855, %v1625, 2147483647
    %v1627 = vand.u32 %v1626, 65535
    %v1628 = vshra.s32 %v1626, 16
    %v1629 = vcvt.s32.f32 %v1627
    %v1630 = vcvt.s32.f32 %v1628
    %1631 = vmin.xlane.f32.xlu0 %v1630
    %v1632 = vpop.xlane.xlu0 %1631
    %vm1633 = vcmp.eq.f32.partialorder %v1630, %v1632
    %v1634 = vsel %vm1633, %v1629, inf
    %1635 = vmin.xlane.f32.xlu0 %v1634
    %v1636 = vpop.xlane.xlu0 %1635
    %v1637 = vcvt.f32.s32 %v1636
    %v1638 = vcvt.f32.s32 %v1632
    %v1639 = vshll.u32 %v1638, 16
    %v1640 = vadd.s32 %v1639, %v1637
    %vm1641 = vcmp.eq.s32.totalorder %v667, %v1640
    %v1642 = vsel %vm1641, 1, 0
    %v1643 = vcvt.s32.f32 %v1642
    %s1644 = sld [smem:[#allocation2 + $0x6]]
    %p1645 = scmp.gt.s32.totalorder %s1644, 0
    %s1646 = scalar_lea.vmem %s4, 12
    %v1647 = vld [vmem:[%s1646] sm:$0x3]
    %s1648 = scalar_select %p1645, 1, 0
    %v1649 = vstv %s1648
    %vm1650 = vcmp.eq.s32.totalorder %v1649, 1
    %v1651 = vsel %vm1650, %v1647, %v1643
    %1653 = vrot.lane.b32.xlu0 %v1571, 64
    %v1654 = vpop.permute.xlu0 %1653
    %v1656 = vsel %vm65, %v1651, %v1654
    %v1657 = vpack.c.bf16 %v1656, %v1656
    %v1659 = vsel %vm720, %v1657, 0
    %1661 = vmatprep.subr.bf16.mxu0 0
    %1662 = vmatpush1.bf16.msra.mxu0 %v712
    %1663 = vmatprep.subr.bf16.mxu0 0
    %1664 = vmatpush1.bf16.msra.mxu0 %v713
    %1665 = vmatprep.subr.bf16.mxu0 0
    %1666 = vmatpush1.bf16.msra.mxu0 %v714
    %1667 = vmatprep.subr.bf16.mxu0 0
    %1668 = vmatpush1.bf16.msra.mxu0 %v715
    %1669 = vmatprep.subr.bf16.mxu0 0
    %1670 = vmatpush1.bf16.msra.mxu0 0
    %1671 = vmatprep.subr.bf16.mxu0 0
    %1672 = vmatpush1.bf16.msra.mxu0 0
    %1673 = vmatprep.subr.bf16.mxu0 0
    %1674 = vmatpush1.bf16.msra.mxu0 0
    %1675 = vmatprep.subr.bf16.mxu0 0
    %1676 = vmatpush1.bf16.msra.mxu0 0
    %1677 = vmatprep.subr.bf16.mxu0 0
    %1678 = vmatpush1.bf16.msra.mxu0 0
    %1679 = vmatprep.subr.bf16.mxu0 0
    %1680 = vmatpush1.bf16.msra.mxu0 0
    %1681 = vmatprep.subr.bf16.mxu0 0
    %1682 = vmatpush1.bf16.msra.mxu0 0
    %1683 = vmatprep.subr.bf16.mxu0 0
    %1684 = vmatpush1.bf16.msra.mxu0 0
    %1685 = vmatprep.subr.bf16.mxu0 0
    %1686 = vmatpush1.bf16.msra.mxu0 0
    %1687 = vmatprep.subr.bf16.mxu0 0
    %1688 = vmatpush1.bf16.msra.mxu0 0
    %1689 = vmatprep.subr.bf16.mxu0 0
    %1690 = vmatpush1.bf16.msra.mxu0 0
    %1691 = vmatprep.subr.bf16.mxu0 0
    %1692 = vmatpush1.bf16.msra.mxu0 0
    %1693 = vmatprep.mubr.bf16.mxu0 0
    %1694 = vmatmul.mubr.bf16.gmra.mrb[0].mxu0 %v1659
    %v1695 = vpop.f32.mrb[0].mxu0
    %v1696 = vadd.f32 %v694, %v1695
    %v1697 = vpop.f32.mrb[0].mxu0
    %v1698 = vpop.f32.mrb[0].mxu0
    %v1699 = vpop.f32.mrb[0].mxu0
    %1700 = vdwg.mxu0
    %v1701 = vxor.u32 %v1696, 2147483648
    %v1702 = vmul.f32 %v1701, 1.442695
    %v1703 = vpow.pop %v1702
    %v1704 = vadd.f32 %v1703, 1.0
    %v1705 = vrcp.pop %v1704
    %v1706 = vmul.f32 1.0, %v1705
    %v1707 = vtanh.pop %v1696
    %v1708 = vmul.f32 %v1706, %v1565
    %1710 = vrot.lane.b32.xlu0 %v1707, 64
    %v1711 = vpop.permute.xlu0 %1710
    %v1713 = vmul.f32 %v1706, %v1711
    %1715 = vrot.lane.b32.xlu0 %v1713, 32
    %v1716 = vpop.permute.xlu0 %1715
    %v1718 = vadd.f32 %v1708, %v1716
    %v1719 = vtanh.pop %v1718
    %1721 = vrot.lane.b32.xlu0 %v1719, 64
    %v1722 = vpop.permute.xlu0 %1721
    %v1724 = vmul.f32 %v1706, %v1722
    %v1725 = vpack.c.bf16 %v1724, %v1724
    %1727 = vrot.lane.b32.xlu0 %v1725, 32
    %v1728 = vpop.permute.xlu0 %1727
    %v1730 = vsel %vm65, %v1728, 0
    %1732 = vmatprep.subr.bf16.mxu0 0
    %1733 = vmatpush1.bf16.msra.mxu0 %v806
    %1734 = vmatprep.subr.bf16.mxu0 0
    %1735 = vmatpush1.bf16.msra.mxu0 %v807
    %1736 = vmatprep.subr.bf16.mxu0 0
    %1737 = vmatpush1.bf16.msra.mxu0 0
    %1738 = vmatprep.subr.bf16.mxu0 0
    %1739 = vmatpush1.bf16.msra.mxu0 0
    %1740 = vmatprep.subr.bf16.mxu0 0
    %1741 = vmatpush1.bf16.msra.mxu0 0
    %1742 = vmatprep.subr.bf16.mxu0 0
    %1743 = vmatpush1.bf16.msra.mxu0 0
    %1744 = vmatprep.subr.bf16.mxu0 0
    %1745 = vmatpush1.bf16.msra.mxu0 0
    %1746 = vmatprep.subr.bf16.mxu0 0
    %1747 = vmatpush1.bf16.msra.mxu0 0
    %1748 = vmatprep.subr.bf16.mxu0 0
    %1749 = vmatpush1.bf16.msra.mxu0 0
    %1750 = vmatprep.subr.bf16.mxu0 0
    %1751 = vmatpush1.bf16.msra.mxu0 0
    %1752 = vmatprep.subr.bf16.mxu0 0
    %1753 = vmatpush1.bf16.msra.mxu0 0
    %1754 = vmatprep.subr.bf16.mxu0 0
    %1755 = vmatpush1.bf16.msra.mxu0 0
    %1756 = vmatprep.subr.bf16.mxu0 0
    %1757 = vmatpush1.bf16.msra.mxu0 0
    %1758 = vmatprep.subr.bf16.mxu0 0
    %1759 = vmatpush1.bf16.msra.mxu0 0
    %1760 = vmatprep.subr.bf16.mxu0 0
    %1761 = vmatpush1.bf16.msra.mxu0 0
    %1762 = vmatprep.subr.bf16.mxu0 0
    %1763 = vmatpush1.bf16.msra.mxu0 0
    %1764 = vmatprep.mubr.bf16.mxu0 0
    %1765 = vmatmul.mubr.bf16.gmra.mrb[0].mxu0 %v1730
    %v1766 = vpop.f32.mrb[0].mxu0
    %v1767 = vadd.f32 %v793, %v1766
    %v1768 = vpop.f32.mrb[0].mxu0
    %v1769 = vpop.f32.mrb[0].mxu0
    %v1770 = vpop.f32.mrb[0].mxu0
    %1771 = vdwg.mxu0
    %s1772 = scalar_lea.vmem [#allocation5], 14
    %1773 = vst [vmem:[%s1772] sm:$0x3] %v1767
    // Predicated region
    $region42: #{seq2seq_forward.1} parent=1 // pred_check
      _
    $region43: #{seq2seq_forward.1} parent=1 // pred_check_branch
      %1775 = sbr.rel (0) target = $region45
    $region44: #{seq2seq_forward.1} parent=1 // pred_region
      %s1777 = ssub.s32 256, 256
      %1778 = vsyncadd [#allocation3], %s1777
      %s1779 = sshll.u32 [#allocation5], 4
      %s1780 = int_to_ptr.vmem [resolvable:$true] %s1779
      %1785 = dma.vmem_to_hbm [thread:$0]  %s1780, 256, %s9, [#allocation3], 32, 32, 2
    $region45: #{seq2seq_forward.1} parent=1 // pred_fallthru
      _
    // Predicated region
    $region46: #{seq2seq_forward.1} parent=1 // pred_check
      _
    $region47: #{seq2seq_forward.1} parent=1 // pred_check_branch
      %1787 = sbr.rel (0) target = $region49
    $region48: #{seq2seq_forward.1} parent=1 // pred_region
      %1788 = dma.done [#allocation3], 256
    $region49: #{seq2seq_forward.1} parent=1 // pred_fallthru
      _
    %1789 = vsyncpa [#allocation3], 1
    %1790 = vsyncpa [#allocation4], 1

</llo_original>
